<compile_context>
chip_gen: v5e
topology: v5e:2x2
jax: 0.10.0
libtpu: 0.0.40
codegen_flags: <defaults>
</compile_context>

<pallas_src>
import math

import jax
import jax.numpy as jnp
from jax.experimental import pallas as pl
from jax.experimental.pallas import tpu as pltpu


_LOG2 = math.log(2.0)


def _ssp(v):
    # shifted_softplus(x) = softplus(x) - log(2), numerically stable form (f32).
    return jnp.maximum(v, 0.0) + jnp.log1p(jnp.exp(-jnp.abs(v))) - jnp.float32(_LOG2)


def _round_up(x, m):
    return ((x + m - 1) // m) * m


def _cdiv(a, b):
    return (a + b - 1) // b


def _device_kind():
    try:
        return jax.devices()[0].device_kind.lower()
    except Exception:
        return ""


def _vmem_capacity_bytes(kind):
    try:
        phys = int(pltpu.get_tpu_info().vmem_capacity_bytes)
    except Exception:
        phys = 0
    if phys <= 0:
        phys = 64 << 20            # conservative fallback (smallest target: v7x per-core)
    if "v7" in kind:
        phys = min(phys, 64 << 20)  # v7x: 64 MiB per TensorCore
    return phys


def _num_tensorcores(kind):
    # v7x exposes 2 TensorCores per chip that "parallel" grid axes shard across;
    # v5e / v6e have 1.
    return 2 if "v7" in kind else 1


def _auto_pair_tile(A, R, F, vmem_phys):
    # Dominant per-pair transients: two [TP, A] one-hot builds (bf16 result +
    # int32 compare temps), ~a dozen [TP, F] f32 intermediates and the
    # double-buffered [TP, R] / [TP]-column tiles.  Budget ~1/4 of physical VMEM
    # for them (rest: resident weights, xw scratch, output partial, headroom).
    bytes_per_pair = 2 * (4 + 2) * A + 12 * 4 * F + 2 * 4 * R + 2 * 1024
    budget = vmem_phys // 4
    tp = budget // max(bytes_per_pair, 1)
    return int(max(128, min(1024, (tp // 128) * 128)))


def _vmem_limit(estimate, vmem_phys):
    cap = max(32 << 20, (vmem_phys * 7) // 8)   # leave headroom for compiler temps
    return int(min(max(estimate, 32 << 20), cap))


# ----------------------------------------------------------------------------- kernels
def pbgnn_scatter_kernel(
    x_ref, fij_ref, idxj_ref, idxi_ref, rcut_ref, arow_ref, acol_ref,
    w_in2f_ref, wf1_ref, bf1_ref, wf2_ref, bf2_ref,
    part_ref,
    xw_ref,
):
    """Pair-tiled gather / filter / scatter-add into a per-core [A, F] partial."""
    t = pl.program_id(1)   # pair-tile index within this core's range

    # ---- prologue (first tile of this core's range): in2f projection + zero ----
    @pl.when(t == 0)
    def _():
        xw = jnp.dot(x_ref[...], w_in2f_ref[...], preferred_element_type=jnp.float32)
        xw_ref[...] = xw.astype(jnp.bfloat16)            # bf16 gather operand (MXU)
        part_ref[0] = jnp.zeros(part_ref.shape[1:], part_ref.dtype)

    # ---- filter_network on this pair tile (f32 element-wise math) --------------
    h = _ssp(jnp.dot(fij_ref[...], wf1_ref[...], preferred_element_type=jnp.float32)
             + bf1_ref[...])
    wij = jnp.dot(h, wf2_ref[...], preferred_element_type=jnp.float32) + bf2_ref[...]
    wij = wij * rcut_ref[...]               # [TP, F] * [TP, 1]; padded pairs: rcut = 0

    # ---- gather x_j = xw[idx_j] via bf16 one-hot MXU matmul ---------------------
    # Hoisted resident atom iota [1, A] vs idx_j column [TP, 1]; direct bool->bf16.
    onehot_j = (arow_ref[...] == idxj_ref[...]).astype(jnp.bfloat16)            # [TP, A]
    x_j = jnp.dot(onehot_j, xw_ref[...], preferred_element_type=jnp.float32)    # [TP, F]

    # ---- continuous-filter conv + scatter_add(idx_i) ----------------------------
    # Pre-transposed one-hot: resident column iota [A, 1] vs lane-major idx_i
    # row [1, TP] -> [A, TP]; no XLU transpose needed.
    x_ij = (x_j * wij).astype(jnp.bfloat16)                                      # [TP, F]
    onehot_i_t = (acol_ref[...] == idxi_ref[...]).astype(jnp.bfloat16)           # [A, TP]
    part_ref[0] += jnp.dot(onehot_i_t, x_ij, preferred_element_type=jnp.float32)
    # TODO(synk): for very large atom counts (A >= ~2-4K) replace the O(P*A*F)
    # one-hot gather/scatter with a scalar-prefetch DMA row gather plus an
    # idx_i-sorted segmented add (bandwidth-only path).
    # TODO(synk): on v7x, evaluate the fp8 MXU path for the one-hot matmuls
    # (one-hot values are exact in fp8) for ~2x on the dominant matmuls.


def pbgnn_f2out_kernel(part_ref, wo1_ref, bo1_ref, wo2_ref, bo2_ref, out_ref):
    """Sum per-core partials and apply the f2out MLP."""
    agg = part_ref[0]
    for c in range(1, part_ref.shape[0]):       # static, tiny (num_cores <= 2)
        agg = agg + part_ref[c]
    h = _ssp(jnp.dot(agg, wo1_ref[...], preferred_element_type=jnp.float32)
             + bo1_ref[...])
    out_ref[...] = (jnp.dot(h, wo2_ref[...], preferred_element_type=jnp.float32)
                    + bo2_ref[...])


# ----------------------------------------------------------------------------- wrapper
def pbgnn_interaction(x, f_ij, idx_i, idx_j, rcut_ij, params, *,
                      pair_tile=None, num_cores=None):
    """Fused PBGNN interaction block.  Weights stored as [in, out], biases [1, out].

    Padding correctness relies on the zero-padding done here (padded pairs get
    rcut = 0 and padded weight/bias rows/cols are zero); do not pass pre-padded
    params containing garbage in the padding.
    """
    n_atoms, n_atom_basis = x.shape
    n_pairs, n_rbf = f_ij.shape
    n_filters = params["w_in2f"].shape[1]

    kind = _device_kind()
    vmem_phys = _vmem_capacity_bytes(kind)
    NC = max(1, int(num_cores) if num_cores is not None else _num_tensorcores(kind))

    # Padded sizes: lane dims -> 128, atoms -> 8, pairs -> NC * T * TP.
    A = _round_up(max(n_atoms, 8), 8)
    B = _round_up(n_atom_basis, 128)
    R = _round_up(n_rbf, 128)
    F = _round_up(n_filters, 128)
    # TODO(synk): if n_filters is tunable, prefer F = 256 on v6e/v7x (256-wide MXU).

    if pair_tile is None:
        pair_tile = _auto_pair_tile(A, R, F, vmem_phys)
    TP = max(128, _round_up(min(int(pair_tile), _round_up(n_pairs, 128)), 128))
    T = max(1, _cdiv(_cdiv(n_pairs, TP), NC))    # pair tiles per core
    P = NC * T * TP

    def pad2(a, r, c):
        a = jnp.asarray(a, jnp.float32)
        return jnp.pad(a, ((0, r - a.shape[0]), (0, c - a.shape[1])))

    x_p = pad2(x, A, B)
    fij_p = pad2(f_ij, P, R)
    idx_j_p = jnp.pad(jnp.asarray(idx_j, jnp.int32), (0, P - n_pairs)).reshape(P, 1)
    idx_i_p = jnp.pad(jnp.asarray(idx_i, jnp.int32), (0, P - n_pairs)).reshape(1, P)
    rcut_p = jnp.pad(jnp.asarray(rcut_ij, jnp.float32), (0, P - n_pairs)).reshape(P, 1)
    arange_row = jnp.arange(A, dtype=jnp.int32).reshape(1, A)
    arange_col = jnp.arange(A, dtype=jnp.int32).reshape(A, 1)

    w_in2f = pad2(params["w_in2f"], B, F)
    wf1 = pad2(params["wf1"], R, F); bf1 = pad2(params["bf1"], 1, F)
    wf2 = pad2(params["wf2"], F, F); bf2 = pad2(params["bf2"], 1, F)
    wo1 = pad2(params["wo1"], F, B); bo1 = pad2(params["bo1"], 1, B)
    wo2 = pad2(params["wo2"], B, B); bo2 = pad2(params["bo2"], 1, B)

    # Constant-index blocks are never re-fetched: single-buffer them to save VMEM.
    def resident(shape):
        return pl.BlockSpec(shape, lambda c, t: (0,) * len(shape),
                            pipeline_mode=pl.Buffered(1))

    in_specs = [
        resident((A, B)),                                      # x
        pl.BlockSpec((TP, R), lambda c, t: (c * T + t, 0)),    # f_ij tile
        pl.BlockSpec((TP, 1), lambda c, t: (c * T + t, 0)),    # idx_j (sublane column)
        pl.BlockSpec((1, TP), lambda c, t: (0, c * T + t)),    # idx_i (lane-major row)
        pl.BlockSpec((TP, 1), lambda c, t: (c * T + t, 0)),    # rcut_ij
        resident((1, A)),                                      # atom iota (row)
        resident((A, 1)),                                      # atom iota (column)
        resident((B, F)),                                      # w_in2f
        resident((R, F)), resident((1, F)),                    # wf1, bf1
        resident((F, F)), resident((1, F)),                    # wf2, bf2
    ]
    out_specs = pl.BlockSpec((1, A, F), lambda c, t: (c, 0, 0))

    f32, bf16, i32 = 4, 2, 4
    vmem_est_1 = (
        (A * B + B * F + R * F + F * F + 16 * F) * f32 + 544 * A     # residents (x1)
        + 2 * (TP * R * f32 + 1056 * TP)                              # pair tiles (x2)
        + 2 * A * F * f32 + A * F * bf16                              # out partial (x2) + xw
        + 2 * TP * A * (bf16 + i32) + 10 * TP * F * f32               # one-hots / temps
        + (4 << 20)
    )
    cost_1 = pl.CostEstimate(
        flops=int(2 * NC * A * B * F + 2 * P * R * F + 2 * P * F * F + 4 * P * A * F),
        transcendentals=int(P * F),
        bytes_accessed=int(f32 * (A * B + P * R + 3 * P + B * F + R * F + F * F
                                  + 2 * F + 2 * A + NC * A * F)),
    )

    partials = pl.pallas_call(
        pbgnn_scatter_kernel,
        out_shape=jax.ShapeDtypeStruct((NC, A, F), jnp.float32),
        grid_spec=pltpu.PrefetchScalarGridSpec(
            num_scalar_prefetch=0,
            grid=(NC, T),
            in_specs=in_specs,
            out_specs=out_specs,
            scratch_shapes=[pltpu.VMEM((A, F), jnp.bfloat16)],   # xw (bf16 gather operand)
        ),
        compiler_params=pltpu.CompilerParams(
            dimension_semantics=("parallel", "arbitrary"),       # cores x pair-reduction
            vmem_limit_bytes=_vmem_limit(vmem_est_1, vmem_phys),
        ),
        cost_estimate=cost_1,
    )(
        x_p, fij_p, idx_j_p, idx_i_p, rcut_p, arange_row, arange_col,
        w_in2f, wf1, bf1, wf2, bf2,
    )

    # ---- kernel 2: reduce per-core partials + f2out (tiny, single step) --------
    def resident2(shape):
        return pl.BlockSpec(shape, lambda i: (0,) * len(shape),
                            pipeline_mode=pl.Buffered(1))

    vmem_est_2 = ((NC * A * F + F * B + B * B + 16 * B + A * B) * f32
                  + (A * F + 2 * A * B) * f32 + (4 << 20))
    cost_2 = pl.CostEstimate(
        flops=int(2 * A * F * B + 2 * A * B * B + NC * A * F),
        transcendentals=int(A * B),
        bytes_accessed=int(f32 * (NC * A * F + F * B + B * B + 2 * B + A * B)),
    )

    out_pad = pl.pallas_call(
        pbgnn_f2out_kernel,
        out_shape=jax.ShapeDtypeStruct((A, B), jnp.float32),
        grid_spec=pltpu.PrefetchScalarGridSpec(
            num_scalar_prefetch=0,
            grid=(1,),
            in_specs=[
                resident2((NC, A, F)),
                resident2((F, B)), resident2((1, B)),
                resident2((B, B)), resident2((1, B)),
            ],
            out_specs=pl.BlockSpec((A, B), lambda i: (0, 0)),
        ),
        compiler_params=pltpu.CompilerParams(
            dimension_semantics=("arbitrary",),
            vmem_limit_bytes=_vmem_limit(vmem_est_2, vmem_phys),
        ),
        cost_estimate=cost_2,
    )(partials, wo1, bo1, wo2, bo2)

    return out_pad[:n_atoms, :n_atom_basis]


# ----------------------------------------------------------------------------- reference / test
def init_params(key, n_atom_basis, n_rbf, n_filters):
    """Deterministic xavier-like init; weights stored as [in, out], biases as [1, out]."""
    ks = jax.random.split(key, 5)

    def xavier(k, fan_in, fan_out):
        lim = math.sqrt(6.0 / (fan_in + fan_out))
        return jax.random.uniform(k, (fan_in, fan_out), jnp.float32, -lim, lim)

    return {
        "w_in2f": xavier(ks[0], n_atom_basis, n_filters),
        "wf1": xavier(ks[1], n_rbf, n_filters),
        "bf1": jnp.zeros((1, n_filters), jnp.float32),
        "wf2": xavier(ks[2], n_filters, n_filters),
        "bf2": jnp.zeros((1, n_filters), jnp.float32),
        "wo1": xavier(ks[3], n_filters, n_atom_basis),
        "bo1": jnp.zeros((1, n_atom_basis), jnp.float32),
        "wo2": xavier(ks[4], n_atom_basis, n_atom_basis),
        "bo2": jnp.zeros((1, n_atom_basis), jnp.float32),
    }


def reference_forward(x, f_ij, idx_i, idx_j, rcut_ij, p):
    """Pure-JAX f32 reference mirroring the PyTorch forward, for validation."""
    def ssp(v):
        return jax.nn.softplus(v) - math.log(2.0)

    xw = x @ p["w_in2f"]
    wij = ssp(f_ij @ p["wf1"] + p["bf1"]) @ p["wf2"] + p["bf2"]
    wij = wij * rcut_ij[:, None]
    x_j = xw[idx_j]
    x_ij = x_j * wij
    agg = jnp.zeros_like(xw).at[idx_i].add(x_ij)
    h = ssp(agg @ p["wo1"] + p["bo1"])
    return h @ p["wo2"] + p["bo2"]


if __name__ == "__main__":
    n_atoms, n_pairs = 24, 300
    n_atom_basis, n_rbf, n_filters = 32, 16, 48

    key = jax.random.PRNGKey(0)
    k_x, k_f, k_i, k_j, k_r, k_p = jax.random.split(key, 6)

    x = jax.random.normal(k_x, (n_atoms, n_atom_basis), jnp.float32)
    f_ij = jax.random.normal(k_f, (n_pairs, n_rbf), jnp.float32)
    idx_i = jax.random.randint(k_i, (n_pairs,), 0, n_atoms, jnp.int32)
    idx_j = jax.random.randint(k_j, (n_pairs,), 0, n_atoms, jnp.int32)
    rcut_ij = jax.random.uniform(k_r, (n_pairs,), jnp.float32)

    params = init_params(k_p, n_atom_basis, n_rbf, n_filters)
    ref = reference_forward(x, f_ij, idx_i, idx_j, rcut_ij, params)

    # 1) auto-tuned pair tile / auto core count.
    out = pbgnn_interaction(x, f_ij, idx_i, idx_j, rcut_ij, params)
    out = jax.block_until_ready(out)
    assert out.shape == (n_atoms, n_atom_basis)
    err1 = float(jnp.max(jnp.abs(out - ref)))
    # bf16 one-hot matmuls (f32 accumulation) introduce small rounding vs the f32 ref.
    assert jnp.allclose(out, ref, atol=2e-2, rtol=2e-2), f"auto config mismatch (max abs err {err1})"

    # 2) small tile + forced 2-core split: exercises the multi-tile reduction grid,
    #    per-core prologue re-init and the partial-sum epilogue kernel (runs
    #    serially but identically on single-core chips).
    out2 = pbgnn_interaction(x, f_ij, idx_i, idx_j, rcut_ij, params,
                             pair_tile=128, num_cores=2)
    out2 = jax.block_until_ready(out2)
    err2 = float(jnp.max(jnp.abs(out2 - ref)))
    assert jnp.allclose(out2, ref, atol=2e-2, rtol=2e-2), f"2-core config mismatch (max abs err {err2})"

    print("KERNEL_OK")
</pallas_src>

<mosaic_0001>
module attributes {stable_mosaic.version = 11 : i64} {
  func.func @pbgnn_scatter_kernel(%arg0: i32, %arg1: i32, %arg2: memref<24x128xf32, #tpu.memory_space<vmem>>, %arg3: memref<384x128xf32, #tpu.memory_space<vmem>>, %arg4: memref<384x1xi32, #tpu.memory_space<vmem>>, %arg5: memref<1x384xi32, #tpu.memory_space<vmem>>, %arg6: memref<384x1xf32, #tpu.memory_space<vmem>>, %arg7: memref<1x24xi32, #tpu.memory_space<vmem>>, %arg8: memref<24x1xi32, #tpu.memory_space<vmem>>, %arg9: memref<128x128xf32, #tpu.memory_space<vmem>>, %arg10: memref<128x128xf32, #tpu.memory_space<vmem>>, %arg11: memref<1x128xf32, #tpu.memory_space<vmem>>, %arg12: memref<128x128xf32, #tpu.memory_space<vmem>>, %arg13: memref<1x128xf32, #tpu.memory_space<vmem>>, %arg14: memref<1x24x128xf32, #tpu.memory_space<vmem>>, %arg15: memref<24x128xbf16, #tpu.memory_space<vmem>>) attributes {dimension_semantics = [#tpu.dimension_semantics<parallel>, #tpu.dimension_semantics<arbitrary>], iteration_bounds = array<i64: 1, 1>, scalar_prefetch = 0 : i64, scratch_operands = 1 : i64, tpu.core_type = #tpu.core_type<tc>, window_params = [{pipeline_mode = #tpu.pipeline_mode<synchronous>, transform_indices = @transform_0, window_bounds = array<i64: 24, 128>}, {transform_indices = @transform_1, window_bounds = array<i64: 384, 128>}, {transform_indices = @transform_2, window_bounds = array<i64: 384, 1>}, {transform_indices = @transform_3, window_bounds = array<i64: 1, 384>}, {transform_indices = @transform_4, window_bounds = array<i64: 384, 1>}, {pipeline_mode = #tpu.pipeline_mode<synchronous>, transform_indices = @transform_5, window_bounds = array<i64: 1, 24>}, {pipeline_mode = #tpu.pipeline_mode<synchronous>, transform_indices = @transform_6, window_bounds = array<i64: 24, 1>}, {pipeline_mode = #tpu.pipeline_mode<synchronous>, transform_indices = @transform_7, window_bounds = array<i64: 128, 128>}, {pipeline_mode = #tpu.pipeline_mode<synchronous>, transform_indices = @transform_8, window_bounds = array<i64: 128, 128>}, {pipeline_mode = #tpu.pipeline_mode<synchronous>, transform_indices = @transform_9, window_bounds = array<i64: 1, 128>}, {pipeline_mode = #tpu.pipeline_mode<synchronous>, transform_indices = @transform_10, window_bounds = array<i64: 128, 128>}, {pipeline_mode = #tpu.pipeline_mode<synchronous>, transform_indices = @transform_11, window_bounds = array<i64: 1, 128>}, {transform_indices = @transform_12, window_bounds = array<i64: 1, 24, 128>}]} {
    %c0_i32 = arith.constant 0 : i32
    %0 = arith.cmpi eq, %arg1, %c0_i32 : i32
    %1 = arith.extui %0 : i1 to i32
    %c0_i32_0 = arith.constant 0 : i32
    %2 = arith.cmpi ne, %1, %c0_i32_0 : i32
    scf.if %2 {
      %c0_34 = arith.constant 0 : index
      %c0_35 = arith.constant 0 : index
      %54 = vector.load %arg2[%c0_34, %c0_35] : memref<24x128xf32, #tpu.memory_space<vmem>>, vector<24x128xf32>
      %c0_36 = arith.constant 0 : index
      %c0_37 = arith.constant 0 : index
      %55 = vector.load %arg9[%c0_36, %c0_37] : memref<128x128xf32, #tpu.memory_space<vmem>>, vector<128x128xf32>
      %cst_38 = arith.constant dense<0.000000e+00> : vector<24x128xf32>
      %56 = tpu.matmul %54, %55, %cst_38 {dimension_numbers = #tpu.dot_dimension_numbers<[1], [0], [0], [1], [0, 0, 1, 1], [], []>} : vector<24x128xf32>, vector<128x128xf32>, vector<24x128xf32> -> vector<24x128xf32>
      %57 = arith.truncf %56 : vector<24x128xf32> to vector<24x128xbf16>
      %c0_39 = arith.constant 0 : index
      %c0_40 = arith.constant 0 : index
      %58 = vector.load %arg15[%c0_39, %c0_40] : memref<24x128xbf16, #tpu.memory_space<vmem>>, vector<24x128xbf16>
      tpu.vector_store %arg15[%c0_39, %c0_40], %57 {strides = array<i32>} : memref<24x128xbf16, #tpu.memory_space<vmem>>, vector<24x128xbf16>,
      %cst_41 = arith.constant 0.000000e+00 : f32
      %59 = vector.broadcast %cst_41 : f32 to vector<24x128xf32>
      %c0_42 = arith.constant 0 : index
      %c0_43 = arith.constant 0 : index
      %c0_44 = arith.constant 0 : index
      %60 = vector.load %arg14[%c0_42, %c0_43, %c0_44] : memref<1x24x128xf32, #tpu.memory_space<vmem>>, vector<1x24x128xf32>
      %61 = vector.shape_cast %60 : vector<1x24x128xf32> to vector<24x128xf32>
      %62 = vector.shape_cast %59 : vector<24x128xf32> to vector<1x24x128xf32>
      tpu.vector_store %arg14[%c0_42, %c0_43, %c0_44], %62 {strides = array<i32>} : memref<1x24x128xf32, #tpu.memory_space<vmem>>, vector<1x24x128xf32>,
    } else {
    }
    %c0 = arith.constant 0 : index
    %c0_1 = arith.constant 0 : index
    %3 = vector.load %arg3[%c0, %c0_1] : memref<384x128xf32, #tpu.memory_space<vmem>>, vector<384x128xf32>
    %c0_2 = arith.constant 0 : index
    %c0_3 = arith.constant 0 : index
    %4 = vector.load %arg10[%c0_2, %c0_3] : memref<128x128xf32, #tpu.memory_space<vmem>>, vector<128x128xf32>
    %cst = arith.constant dense<0.000000e+00> : vector<384x128xf32>
    %5 = tpu.matmul %3, %4, %cst {dimension_numbers = #tpu.dot_dimension_numbers<[1], [0], [0], [1], [0, 0, 1, 1], [], []>} : vector<384x128xf32>, vector<128x128xf32>, vector<384x128xf32> -> vector<384x128xf32>
    %c0_4 = arith.constant 0 : index
    %c0_5 = arith.constant 0 : index
    %6 = vector.load %arg11[%c0_4, %c0_5] : memref<1x128xf32, #tpu.memory_space<vmem>>, vector<1x128xf32>
    %7 = vector.broadcast %6 : vector<1x128xf32> to vector<384x128xf32>
    %8 = arith.addf %5, %7 : vector<384x128xf32>
    %cst_6 = arith.constant 0.000000e+00 : f32
    %9 = vector.broadcast %cst_6 : f32 to vector<384x128xf32>
    %10 = arith.maximumf %8, %9 : vector<384x128xf32>
    %11 = math.absf %8 : vector<384x128xf32>
    %cst_7 = arith.constant 0.000000e+00 : f32
    %12 = vector.broadcast %cst_7 : f32 to vector<384x128xf32>
    %13 = arith.subf %12, %11 : vector<384x128xf32>
    %14 = math.exp %13 : vector<384x128xf32>
    %15 = math.log1p %14 : vector<384x128xf32>
    %16 = arith.addf %10, %15 : vector<384x128xf32>
    %cst_8 = arith.constant 0.693147182 : f32
    %17 = vector.broadcast %cst_8 : f32 to vector<384x128xf32>
    %18 = arith.subf %16, %17 : vector<384x128xf32>
    %c0_9 = arith.constant 0 : index
    %c0_10 = arith.constant 0 : index
    %19 = vector.load %arg12[%c0_9, %c0_10] : memref<128x128xf32, #tpu.memory_space<vmem>>, vector<128x128xf32>
    %cst_11 = arith.constant dense<0.000000e+00> : vector<384x128xf32>
    %20 = tpu.matmul %18, %19, %cst_11 {dimension_numbers = #tpu.dot_dimension_numbers<[1], [0], [0], [1], [0, 0, 1, 1], [], []>} : vector<384x128xf32>, vector<128x128xf32>, vector<384x128xf32> -> vector<384x128xf32>
    %c0_12 = arith.constant 0 : index
    %c0_13 = arith.constant 0 : index
    %21 = vector.load %arg13[%c0_12, %c0_13] : memref<1x128xf32, #tpu.memory_space<vmem>>, vector<1x128xf32>
    %22 = vector.broadcast %21 : vector<1x128xf32> to vector<384x128xf32>
    %23 = arith.addf %20, %22 : vector<384x128xf32>
    %c0_14 = arith.constant 0 : index
    %c0_15 = arith.constant 0 : index
    %24 = vector.load %arg6[%c0_14, %c0_15] : memref<384x1xf32, #tpu.memory_space<vmem>>, vector<384x1xf32>
    %25 = vector.broadcast %24 : vector<384x1xf32> to vector<384x128xf32>
    %26 = arith.mulf %23, %25 : vector<384x128xf32>
    %c0_16 = arith.constant 0 : index
    %c0_17 = arith.constant 0 : index
    %27 = vector.load %arg7[%c0_16, %c0_17] : memref<1x24xi32, #tpu.memory_space<vmem>>, vector<1x24xi32>
    %c0_18 = arith.constant 0 : index
    %c0_19 = arith.constant 0 : index
    %28 = vector.load %arg4[%c0_18, %c0_19] : memref<384x1xi32, #tpu.memory_space<vmem>>, vector<384x1xi32>
    %29 = vector.broadcast %27 : vector<1x24xi32> to vector<384x24xi32>
    %30 = vector.broadcast %28 : vector<384x1xi32> to vector<384x24xi32>
    %31 = arith.cmpi eq, %29, %30 : vector<384x24xi32>
    %32 = arith.extui %31 : vector<384x24xi1> to vector<384x24xi32>
    %33 = arith.sitofp %32 : vector<384x24xi32> to vector<384x24xf32>
    %34 = arith.truncf %33 : vector<384x24xf32> to vector<384x24xbf16>
    %c0_20 = arith.constant 0 : index
    %c0_21 = arith.constant 0 : index
    %35 = vector.load %arg15[%c0_20, %c0_21] : memref<24x128xbf16, #tpu.memory_space<vmem>>, vector<24x128xbf16>
    %cst_22 = arith.constant dense<0.000000e+00> : vector<384x128xf32>
    %36 = tpu.matmul %34, %35, %cst_22 {dimension_numbers = #tpu.dot_dimension_numbers<[1], [0], [0], [1], [0, 0, 1, 1], [], []>} : vector<384x24xbf16>, vector<24x128xbf16>, vector<384x128xf32> -> vector<384x128xf32>
    %37 = arith.mulf %36, %26 : vector<384x128xf32>
    %38 = arith.truncf %37 : vector<384x128xf32> to vector<384x128xbf16>
    %c0_23 = arith.constant 0 : index
    %c0_24 = arith.constant 0 : index
    %39 = vector.load %arg8[%c0_23, %c0_24] : memref<24x1xi32, #tpu.memory_space<vmem>>, vector<24x1xi32>
    %c0_25 = arith.constant 0 : index
    %c0_26 = arith.constant 0 : index
    %40 = vector.load %arg5[%c0_25, %c0_26] : memref<1x384xi32, #tpu.memory_space<vmem>>, vector<1x384xi32>
    %41 = vector.broadcast %39 : vector<24x1xi32> to vector<24x384xi32>
    %42 = vector.broadcast %40 : vector<1x384xi32> to vector<24x384xi32>
    %43 = arith.cmpi eq, %41, %42 : vector<24x384xi32>
    %44 = arith.extui %43 : vector<24x384xi1> to vector<24x384xi32>
    %45 = arith.sitofp %44 : vector<24x384xi32> to vector<24x384xf32>
    %46 = arith.truncf %45 : vector<24x384xf32> to vector<24x384xbf16>
    %c0_27 = arith.constant 0 : index
    %c0_28 = arith.constant 0 : index
    %c0_29 = arith.constant 0 : index
    %47 = vector.load %arg14[%c0_27, %c0_28, %c0_29] : memref<1x24x128xf32, #tpu.memory_space<vmem>>, vector<1x24x128xf32>
    %48 = vector.shape_cast %47 : vector<1x24x128xf32> to vector<24x128xf32>
    %cst_30 = arith.constant dense<0.000000e+00> : vector<24x128xf32>
    %49 = tpu.matmul %46, %38, %cst_30 {dimension_numbers = #tpu.dot_dimension_numbers<[1], [0], [0], [1], [0, 0, 1, 1], [], []>} : vector<24x384xbf16>, vector<384x128xbf16>, vector<24x128xf32> -> vector<24x128xf32>
    %50 = arith.addf %48, %49 : vector<24x128xf32>
    %c0_31 = arith.constant 0 : index
    %c0_32 = arith.constant 0 : index
    %c0_33 = arith.constant 0 : index
    %51 = vector.load %arg14[%c0_31, %c0_32, %c0_33] : memref<1x24x128xf32, #tpu.memory_space<vmem>>, vector<1x24x128xf32>
    %52 = vector.shape_cast %51 : vector<1x24x128xf32> to vector<24x128xf32>
    %53 = vector.shape_cast %50 : vector<24x128xf32> to vector<1x24x128xf32>
    tpu.vector_store %arg14[%c0_31, %c0_32, %c0_33], %53 {strides = array<i32>} : memref<1x24x128xf32, #tpu.memory_space<vmem>>, vector<1x24x128xf32>,
    return
  }
  func.func @transform_0(%arg0: i32, %arg1: i32) -> (i32, i32) {
    %c0_i32 = arith.constant 0 : i32
    %c0_i32_0 = arith.constant 0 : i32
    %c0_i32_1 = arith.constant 0 : i32
    return %c0_i32, %c0_i32_0 : i32, i32
  }
  func.func @transform_1(%arg0: i32, %arg1: i32) -> (i32, i32) {
    %c1_i32 = arith.constant 1 : i32
    %0 = arith.muli %arg0, %c1_i32 : i32
    %1 = arith.addi %0, %arg1 : i32
    %c0_i32 = arith.constant 0 : i32
    %c0_i32_0 = arith.constant 0 : i32
    return %1, %c0_i32 : i32, i32
  }
  func.func @transform_2(%arg0: i32, %arg1: i32) -> (i32, i32) {
    %c1_i32 = arith.constant 1 : i32
    %0 = arith.muli %arg0, %c1_i32 : i32
    %1 = arith.addi %0, %arg1 : i32
    %c0_i32 = arith.constant 0 : i32
    %c0_i32_0 = arith.constant 0 : i32
    return %1, %c0_i32 : i32, i32
  }
  func.func @transform_3(%arg0: i32, %arg1: i32) -> (i32, i32) {
    %c1_i32 = arith.constant 1 : i32
    %0 = arith.muli %arg0, %c1_i32 : i32
    %1 = arith.addi %0, %arg1 : i32
    %c0_i32 = arith.constant 0 : i32
    %c0_i32_0 = arith.constant 0 : i32
    return %c0_i32, %1 : i32, i32
  }
  func.func @transform_4(%arg0: i32, %arg1: i32) -> (i32, i32) {
    %c1_i32 = arith.constant 1 : i32
    %0 = arith.muli %arg0, %c1_i32 : i32
    %1 = arith.addi %0, %arg1 : i32
    %c0_i32 = arith.constant 0 : i32
    %c0_i32_0 = arith.constant 0 : i32
    return %1, %c0_i32 : i32, i32
  }
  func.func @transform_5(%arg0: i32, %arg1: i32) -> (i32, i32) {
    %c0_i32 = arith.constant 0 : i32
    %c0_i32_0 = arith.constant 0 : i32
    %c0_i32_1 = arith.constant 0 : i32
    return %c0_i32, %c0_i32_0 : i32, i32
  }
  func.func @transform_6(%arg0: i32, %arg1: i32) -> (i32, i32) {
    %c0_i32 = arith.constant 0 : i32
    %c0_i32_0 = arith.constant 0 : i32
    %c0_i32_1 = arith.constant 0 : i32
    return %c0_i32, %c0_i32_0 : i32, i32
  }
  func.func @transform_7(%arg0: i32, %arg1: i32) -> (i32, i32) {
    %c0_i32 = arith.constant 0 : i32
    %c0_i32_0 = arith.constant 0 : i32
    %c0_i32_1 = arith.constant 0 : i32
    return %c0_i32, %c0_i32_0 : i32, i32
  }
  func.func @transform_8(%arg0: i32, %arg1: i32) -> (i32, i32) {
    %c0_i32 = arith.constant 0 : i32
    %c0_i32_0 = arith.constant 0 : i32
    %c0_i32_1 = arith.constant 0 : i32
    return %c0_i32, %c0_i32_0 : i32, i32
  }
  func.func @transform_9(%arg0: i32, %arg1: i32) -> (i32, i32) {
    %c0_i32 = arith.constant 0 : i32
    %c0_i32_0 = arith.constant 0 : i32
    %c0_i32_1 = arith.constant 0 : i32
    return %c0_i32, %c0_i32_0 : i32, i32
  }
  func.func @transform_10(%arg0: i32, %arg1: i32) -> (i32, i32) {
    %c0_i32 = arith.constant 0 : i32
    %c0_i32_0 = arith.constant 0 : i32
    %c0_i32_1 = arith.constant 0 : i32
    return %c0_i32, %c0_i32_0 : i32, i32
  }
  func.func @transform_11(%arg0: i32, %arg1: i32) -> (i32, i32) {
    %c0_i32 = arith.constant 0 : i32
    %c0_i32_0 = arith.constant 0 : i32
    %c0_i32_1 = arith.constant 0 : i32
    return %c0_i32, %c0_i32_0 : i32, i32
  }
  func.func @transform_12(%arg0: i32, %arg1: i32) -> (i32, i32, i32) {
    %c0_i32 = arith.constant 0 : i32
    %c0_i32_0 = arith.constant 0 : i32
    %c0_i32_1 = arith.constant 0 : i32
    return %arg0, %c0_i32, %c0_i32_0 : i32, i32, i32
  }
}

</mosaic_0001>

<llo_original>
// kernel: tpu_custom_call.1
$region0: #{tpu_custom_call.1}
  #allocation0 [shape = 'u32[]', space=smem, size = 0x4, offset = 0x4, fixed_abs, tag = 'smem constant byte address 0x4 - core index']
  #allocation1 [shape = 'u32[72,128]{1,0:T(1,128)}', space=vmem, size = 0x9000, scoped, tag = 'internal scratch']
  #allocation2 [shape = 'bf16[24,128]{1,0:T(8,128)(2,1)}', space=vmem, size = 0x1800, scoped, tag = 'scratch operand']
  %s0 = inlined_call_operand.vmem [shape: f32[24,128], index: 0, kind: input, shape index: {}]
  %s1 = inlined_call_operand.vmem [shape: f32[384,128], index: 1, kind: input, shape index: {}]
  %s2 = inlined_call_operand.vmem [shape: s32[384,1], index: 2, kind: input, shape index: {}]
  %s3 = inlined_call_operand.vmem [shape: s32[1,384], index: 3, kind: input, shape index: {}]
  %s4 = inlined_call_operand.vmem [shape: f32[384,1], index: 4, kind: input, shape index: {}]
  %s5 = inlined_call_operand.vmem [shape: s32[1,24], index: 5, kind: input, shape index: {}]
  %s6 = inlined_call_operand.vmem [shape: s32[24,1], index: 6, kind: input, shape index: {}]
  %s7 = inlined_call_operand.vmem [shape: f32[128,128], index: 7, kind: input, shape index: {}]
  %s8 = inlined_call_operand.vmem [shape: f32[128,128], index: 8, kind: input, shape index: {}]
  %s9 = inlined_call_operand.vmem [shape: f32[1,128], index: 9, kind: input, shape index: {}]
  %s10 = inlined_call_operand.vmem [shape: f32[128,128], index: 10, kind: input, shape index: {}]
  %s11 = inlined_call_operand.vmem [shape: f32[1,128], index: 11, kind: input, shape index: {}]
  %s12 = inlined_call_operand.hbm [shape: f32[1,24,128], index: 12, kind: output, shape index: {}]
  %s13 = sld [smem:[#allocation0]]
  $region62: #{tpu_custom_call.1} parent=0
    _
  %s15 = ssub.s32 1, %s13
  %s16 = scalar_select 0, %s15, %s13
  $region1: #{tpu_custom_call.1} parent=0
    #allocation3 [shape = 'u8[12288]{0}', space=vmem, size = 0x3000, scoped, tag = 'output window, operand 0, single buffered']
    #allocation4 [shape = 's32[1]{0}', space=sflag, size = 0x4, scoped, tag = 'scoped memory for tpu_custom_call.1']
    %17 = vsyncpa [#allocation4], 0
    // Predicated region
    $region2: #{tpu_custom_call.1} parent=1 // pred_check
      _
    $region3: #{tpu_custom_call.1} parent=1 // pred_check_branch
      %19 = sbr.rel (0) target = $region5
    $region4: #{tpu_custom_call.1} parent=1 // pred_region
      _
    $region5: #{tpu_custom_call.1} parent=1 // pred_fallthru
      _
    // Predicated region
    $region6: #{tpu_custom_call.1} parent=1 // pred_check
      _
    $region7: #{tpu_custom_call.1} parent=1 // pred_check_branch
      %21 = sbr.rel (0) target = $region9
    $region8: #{tpu_custom_call.1} parent=1 // pred_region
      %s22 = sadd.s32 0, 0
      %s23 = smul.u32 48, %s22
      %p24 = scmp.lt.s32.totalorder %s23, 47
      %s25 = scalar_select %p24, %s23, 47
      %s26 = smul.addr %s25, 8
      %s27 = scalar_lea.vmem %s1, %s26
      %s28 = sadd.s32 0, 0
      %s29 = smul.u32 48, %s28
    $region9: #{tpu_custom_call.1} parent=1 // pred_fallthru
      _
    // Predicated region
    $region10: #{tpu_custom_call.1} parent=1 // pred_check
      _
    $region11: #{tpu_custom_call.1} parent=1 // pred_check_branch
      %31 = sbr.rel (0) target = $region13
    $region12: #{tpu_custom_call.1} parent=1 // pred_region
      %s32 = sadd.s32 0, 0
      %s33 = smul.u32 48, %s32
      %p34 = scmp.lt.s32.totalorder %s33, 47
      %s35 = scalar_select %p34, %s33, 47
      %s36 = smul.addr %s35, 8
      %s37 = scalar_lea.vmem %s2, %s36
      %s38 = sadd.s32 0, 0
      %s39 = smul.u32 48, %s38
    $region13: #{tpu_custom_call.1} parent=1 // pred_fallthru
      _
    // Predicated region
    $region14: #{tpu_custom_call.1} parent=1 // pred_check
      _
    $region15: #{tpu_custom_call.1} parent=1 // pred_check_branch
      %41 = sbr.rel (0) target = $region17
    $region16: #{tpu_custom_call.1} parent=1 // pred_region
      %s42 = sadd.s32 0, 0
      %s43 = smul.u32 3, %s42
      %p44 = scmp.lt.s32.totalorder %s43, 2
      %s45 = scalar_select %p44, %s43, 2
      %s46 = scalar_lea.vmem %s3, %s45
      %s47 = sadd.s32 0, 0
      %s48 = smul.u32 3, %s47
    $region17: #{tpu_custom_call.1} parent=1 // pred_fallthru
      _
    // Predicated region
    $region18: #{tpu_custom_call.1} parent=1 // pred_check
      _
    $region19: #{tpu_custom_call.1} parent=1 // pred_check_branch
      %50 = sbr.rel (0) target = $region21
    $region20: #{tpu_custom_call.1} parent=1 // pred_region
      %s51 = sadd.s32 0, 0
      %s52 = smul.u32 48, %s51
      %p53 = scmp.lt.s32.totalorder %s52, 47
      %s54 = scalar_select %p53, %s52, 47
      %s55 = smul.addr %s54, 8
      %s56 = scalar_lea.vmem %s4, %s55
      %s57 = sadd.s32 0, 0
      %s58 = smul.u32 48, %s57
    $region21: #{tpu_custom_call.1} parent=1 // pred_fallthru
      _
    // Predicated region
    $region22: #{tpu_custom_call.1} parent=1 // pred_check
      _
    $region23: #{tpu_custom_call.1} parent=1 // pred_check_branch
      %60 = sbr.rel (0) target = $region25
    $region24: #{tpu_custom_call.1} parent=1 // pred_region
      _
    $region25: #{tpu_custom_call.1} parent=1 // pred_fallthru
      _
    // Predicated region
    $region26: #{tpu_custom_call.1} parent=1 // pred_check
      _
    $region27: #{tpu_custom_call.1} parent=1 // pred_check_branch
      %62 = sbr.rel (0) target = $region29
    $region28: #{tpu_custom_call.1} parent=1 // pred_region
      _
    $region29: #{tpu_custom_call.1} parent=1 // pred_fallthru
      _
    // Predicated region
    $region30: #{tpu_custom_call.1} parent=1 // pred_check
      _
    $region31: #{tpu_custom_call.1} parent=1 // pred_check_branch
      %64 = sbr.rel (0) target = $region33
    $region32: #{tpu_custom_call.1} parent=1 // pred_region
      _
    $region33: #{tpu_custom_call.1} parent=1 // pred_fallthru
      _
    // Predicated region
    $region34: #{tpu_custom_call.1} parent=1 // pred_check
      _
    $region35: #{tpu_custom_call.1} parent=1 // pred_check_branch
      %66 = sbr.rel (0) target = $region37
    $region36: #{tpu_custom_call.1} parent=1 // pred_region
      _
    $region37: #{tpu_custom_call.1} parent=1 // pred_fallthru
      _
    // Predicated region
    $region38: #{tpu_custom_call.1} parent=1 // pred_check
      _
    $region39: #{tpu_custom_call.1} parent=1 // pred_check_branch
      %68 = sbr.rel (0) target = $region41
    $region40: #{tpu_custom_call.1} parent=1 // pred_region
      _
    $region41: #{tpu_custom_call.1} parent=1 // pred_fallthru
      _
    // Predicated region
    $region42: #{tpu_custom_call.1} parent=1 // pred_check
      _
    $region43: #{tpu_custom_call.1} parent=1 // pred_check_branch
      %70 = sbr.rel (0) target = $region45
    $region44: #{tpu_custom_call.1} parent=1 // pred_region
      _
    $region45: #{tpu_custom_call.1} parent=1 // pred_fallthru
      _
    // Predicated region
    $region46: #{tpu_custom_call.1} parent=1 // pred_check
      _
    $region47: #{tpu_custom_call.1} parent=1 // pred_check_branch
      %72 = sbr.rel (0) target = $region49
    $region48: #{tpu_custom_call.1} parent=1 // pred_region
      _
    $region49: #{tpu_custom_call.1} parent=1 // pred_fallthru
      _
    %s73 = sadd.s32 0, 0
    %s74 = smul.u32 48, %s73
    %p75 = scmp.lt.s32.totalorder %s74, 47
    %s76 = scalar_select %p75, %s74, 47
    %s77 = smul.addr %s76, 8
    %s78 = scalar_lea.vmem %s1, %s77
    %s79 = sadd.s32 0, 0
    %s80 = smul.u32 48, %s79
    %p81 = scmp.lt.s32.totalorder %s80, 47
    %s82 = scalar_select %p81, %s80, 47
    %s83 = smul.addr %s82, 8
    %s84 = scalar_lea.vmem %s2, %s83
    %s85 = sadd.s32 0, 0
    %s86 = smul.u32 3, %s85
    %p87 = scmp.lt.s32.totalorder %s86, 2
    %s88 = scalar_select %p87, %s86, 2
    %s89 = scalar_lea.vmem %s3, %s88
    %s90 = sadd.s32 0, 0
    %s91 = smul.u32 48, %s90
    %p92 = scmp.lt.s32.totalorder %s91, 47
    %s93 = scalar_select %p92, %s91, 47
    %s94 = smul.addr %s93, 8
    %s95 = scalar_lea.vmem %s4, %s94
    %s96 = sadd.s32 0, 0
    %s97 = smul.u32 48, %s96
    %p98 = scmp.lt.s32.totalorder %s97, 47
    %s99 = scalar_select %p98, %s97, 47
    %s100 = smul.addr %s99, 8
    %s101 = scalar_lea.vmem %s1, %s100
    %s102 = sadd.s32 0, 0
    %s103 = smul.u32 48, %s102
    %s104 = sadd.s32 0, 0
    %s105 = smul.u32 48, %s104
    %p106 = scmp.lt.s32.totalorder %s105, 47
    %s107 = scalar_select %p106, %s105, 47
    %s108 = smul.addr %s107, 8
    %s109 = scalar_lea.vmem %s2, %s108
    %s110 = sadd.s32 0, 0
    %s111 = smul.u32 48, %s110
    %s112 = sadd.s32 0, 0
    %s113 = smul.u32 3, %s112
    %p114 = scmp.lt.s32.totalorder %s113, 2
    %s115 = scalar_select %p114, %s113, 2
    %s116 = scalar_lea.vmem %s3, %s115
    %s117 = sadd.s32 0, 0
    %s118 = smul.u32 3, %s117
    %s119 = sadd.s32 0, 0
    %s120 = smul.u32 48, %s119
    %p121 = scmp.lt.s32.totalorder %s120, 47
    %s122 = scalar_select %p121, %s120, 47
    %s123 = smul.addr %s122, 8
    %s124 = scalar_lea.vmem %s4, %s123
    %s125 = sadd.s32 0, 0
    %s126 = smul.u32 48, %s125
    %p128 = scmp.eq.s32.totalorder 0, 0
    // Predicated region
    $region50: #{tpu_custom_call.1} parent=1 // pred_check
      %p129 = pneg %p128
    $region51: #{tpu_custom_call.1} parent=1 // pred_check_branch
      %131 = sbr.rel (%p129) target = $region53
    $region52: #{tpu_custom_call.1} parent=1 // pred_region
      %v132 = vld [vmem:[%s0] sm:$0xff]
      %v133 = vld [vmem:[%s0 + $0x8] sm:$0xff]
      %v134 = vld [vmem:[%s0 + $0x10] sm:$0xff]
      %v135 = vld [vmem:[%s7] sm:$0xff]
      %v136 = vld [vmem:[%s7 + $0x8] sm:$0xff]
      %v137 = vld [vmem:[%s7 + $0x10] sm:$0xff]
      %v138 = vld [vmem:[%s7 + $0x18] sm:$0xff]
      %v139 = vld [vmem:[%s7 + $0x20] sm:$0xff]
      %v140 = vld [vmem:[%s7 + $0x28] sm:$0xff]
      %v141 = vld [vmem:[%s7 + $0x30] sm:$0xff]
      %v142 = vld [vmem:[%s7 + $0x38] sm:$0xff]
      %v143 = vld [vmem:[%s7 + $0x40] sm:$0xff]
      %v144 = vld [vmem:[%s7 + $0x48] sm:$0xff]
      %v145 = vld [vmem:[%s7 + $0x50] sm:$0xff]
      %v146 = vld [vmem:[%s7 + $0x58] sm:$0xff]
      %v147 = vld [vmem:[%s7 + $0x60] sm:$0xff]
      %v148 = vld [vmem:[%s7 + $0x68] sm:$0xff]
      %v149 = vld [vmem:[%s7 + $0x70] sm:$0xff]
      %v150 = vld [vmem:[%s7 + $0x78] sm:$0xff]
      %151 = vmatpush.msra.mxu0 %v150
      %152 = vmatpush.msra.mxu0 %v149
      %153 = vmatpush.msra.mxu0 %v148
      %154 = vmatpush.msra.mxu0 %v147
      %155 = vmatpush.msra.mxu0 %v146
      %156 = vmatpush.msra.mxu0 %v145
      %157 = vmatpush.msra.mxu0 %v144
      %158 = vmatpush.msra.mxu0 %v143
      %159 = vmatpush.msra.mxu0 %v142
      %160 = vmatpush.msra.mxu0 %v141
      %161 = vmatpush.msra.mxu0 %v140
      %162 = vmatpush.msra.mxu0 %v139
      %163 = vmatpush.msra.mxu0 %v138
      %164 = vmatpush.msra.mxu0 %v137
      %165 = vmatpush.msra.mxu0 %v136
      %166 = vmatpush.msra.mxu0 %v135
      %167 = vmatmul.f32.gmra.mxu0 %v132
      %v168 = vpop.f32.mrf.mxu0
      %v169 = vadd.f32 0.0, %v168
      %170 = vmatmul.f32.gmra.mxu0 %v133
      %v171 = vpop.f32.mrf.mxu0
      %v172 = vadd.f32 0.0, %v171
      %173 = vmatmul.f32.gmra.mxu0 %v134
      %v174 = vpop.f32.mrf.mxu0
      %v175 = vadd.f32 0.0, %v174
      %176 = vdwg.mxu0
      %v177 = vpack.c.bf16 %v169, %v169
      %v178 = vpack.c.bf16 %v172, %v172
      %v179 = vpack.c.bf16 %v175, %v175
      %180 = vst [vmem:[#allocation2] sm:$0xf] %v177
      %181 = vst [vmem:[#allocation2 + $0x4] sm:$0xf] %v178
      %182 = vst [vmem:[#allocation2 + $0x8] sm:$0xf] %v179
      %183 = vst [vmem:[#allocation3] sm:$0xff] 0.0
      %184 = vst [vmem:[#allocation3 + $0x8] sm:$0xff] 0.0
      %185 = vst [vmem:[#allocation3 + $0x10] sm:$0xff] 0.0
    $region53: #{tpu_custom_call.1} parent=1 // pred_fallthru
      _
    %v186 = vld [vmem:[%s101] sm:$0xff]
    %v187 = vld [vmem:[%s101 + $0x8] sm:$0xff]
    %v188 = vld [vmem:[%s101 + $0x10] sm:$0xff]
    %v189 = vld [vmem:[%s101 + $0x18] sm:$0xff]
    %v190 = vld [vmem:[%s101 + $0x20] sm:$0xff]
    %v191 = vld [vmem:[%s101 + $0x28] sm:$0xff]
    %v192 = vld [vmem:[%s101 + $0x30] sm:$0xff]
    %v193 = vld [vmem:[%s101 + $0x38] sm:$0xff]
    %v194 = vld [vmem:[%s101 + $0x40] sm:$0xff]
    %v195 = vld [vmem:[%s101 + $0x48] sm:$0xff]
    %v196 = vld [vmem:[%s101 + $0x50] sm:$0xff]
    %v197 = vld [vmem:[%s101 + $0x58] sm:$0xff]
    %v198 = vld [vmem:[%s101 + $0x60] sm:$0xff]
    %v199 = vld [vmem:[%s101 + $0x68] sm:$0xff]
    %v200 = vld [vmem:[%s101 + $0x70] sm:$0xff]
    %v201 = vld [vmem:[%s101 + $0x78] sm:$0xff]
    %v202 = vld [vmem:[%s101 + $0x80] sm:$0xff]
    %v203 = vld [vmem:[%s101 + $0x88] sm:$0xff]
    %v204 = vld [vmem:[%s101 + $0x90] sm:$0xff]
    %v205 = vld [vmem:[%s101 + $0x98] sm:$0xff]
    %v206 = vld [vmem:[%s101 + $0xa0] sm:$0xff]
    %v207 = vld [vmem:[%s101 + $0xa8] sm:$0xff]
    %v208 = vld [vmem:[%s101 + $0xb0] sm:$0xff]
    %v209 = vld [vmem:[%s101 + $0xb8] sm:$0xff]
    %v210 = vld [vmem:[%s101 + $0xc0] sm:$0xff]
    %v211 = vld [vmem:[%s101 + $0xc8] sm:$0xff]
    %v212 = vld [vmem:[%s101 + $0xd0] sm:$0xff]
    %v213 = vld [vmem:[%s101 + $0xd8] sm:$0xff]
    %v214 = vld [vmem:[%s101 + $0xe0] sm:$0xff]
    %v215 = vld [vmem:[%s101 + $0xe8] sm:$0xff]
    %v216 = vld [vmem:[%s101 + $0xf0] sm:$0xff]
    %v217 = vld [vmem:[%s101 + $0xf8] sm:$0xff]
    %v218 = vld [vmem:[%s101 + $0x100] sm:$0xff]
    %v219 = vld [vmem:[%s101 + $0x108] sm:$0xff]
    %v220 = vld [vmem:[%s101 + $0x110] sm:$0xff]
    %v221 = vld [vmem:[%s101 + $0x118] sm:$0xff]
    %v222 = vld [vmem:[%s101 + $0x120] sm:$0xff]
    %v223 = vld [vmem:[%s101 + $0x128] sm:$0xff]
    %v224 = vld [vmem:[%s101 + $0x130] sm:$0xff]
    %v225 = vld [vmem:[%s101 + $0x138] sm:$0xff]
    %v226 = vld [vmem:[%s101 + $0x140] sm:$0xff]
    %v227 = vld [vmem:[%s101 + $0x148] sm:$0xff]
    %v228 = vld [vmem:[%s101 + $0x150] sm:$0xff]
    %v229 = vld [vmem:[%s101 + $0x158] sm:$0xff]
    %v230 = vld [vmem:[%s101 + $0x160] sm:$0xff]
    %v231 = vld [vmem:[%s101 + $0x168] sm:$0xff]
    %v232 = vld [vmem:[%s101 + $0x170] sm:$0xff]
    %v233 = vld [vmem:[%s101 + $0x178] sm:$0xff]
    %v234 = vld [vmem:[%s8] sm:$0xff]
    %v235 = vld [vmem:[%s8 + $0x8] sm:$0xff]
    %v236 = vld [vmem:[%s8 + $0x10] sm:$0xff]
    %v237 = vld [vmem:[%s8 + $0x18] sm:$0xff]
    %v238 = vld [vmem:[%s8 + $0x20] sm:$0xff]
    %v239 = vld [vmem:[%s8 + $0x28] sm:$0xff]
    %v240 = vld [vmem:[%s8 + $0x30] sm:$0xff]
    %v241 = vld [vmem:[%s8 + $0x38] sm:$0xff]
    %v242 = vld [vmem:[%s8 + $0x40] sm:$0xff]
    %v243 = vld [vmem:[%s8 + $0x48] sm:$0xff]
    %v244 = vld [vmem:[%s8 + $0x50] sm:$0xff]
    %v245 = vld [vmem:[%s8 + $0x58] sm:$0xff]
    %v246 = vld [vmem:[%s8 + $0x60] sm:$0xff]
    %v247 = vld [vmem:[%s8 + $0x68] sm:$0xff]
    %v248 = vld [vmem:[%s8 + $0x70] sm:$0xff]
    %v249 = vld [vmem:[%s8 + $0x78] sm:$0xff]
    %v250 = vld [vmem:[%s9] sm:$0x1]
    %v252 = vperm.slane %v250, 0
    %254 = vmatpush.msra.mxu0 %v249
    %255 = vmatpush.msra.mxu0 %v248
    %256 = vmatpush.msra.mxu0 %v247
    %257 = vmatpush.msra.mxu0 %v246
    %258 = vmatpush.msra.mxu0 %v245
    %259 = vmatpush.msra.mxu0 %v244
    %260 = vmatpush.msra.mxu0 %v243
    %261 = vmatpush.msra.mxu0 %v242
    %262 = vmatpush.msra.mxu0 %v241
    %263 = vmatpush.msra.mxu0 %v240
    %264 = vmatpush.msra.mxu0 %v239
    %265 = vmatpush.msra.mxu0 %v238
    %266 = vmatpush.msra.mxu0 %v237
    %267 = vmatpush.msra.mxu0 %v236
    %268 = vmatpush.msra.mxu0 %v235
    %269 = vmatpush.msra.mxu0 %v234
    %270 = vmatmul.f32.gmra.mxu0 %v186
    %v271 = vpop.f32.mrf.mxu0
    %v272 = vadd.f32 %v252, %v271
    %273 = vmatmul.f32.gmra.mxu0 %v187
    %v274 = vpop.f32.mrf.mxu0
    %v275 = vadd.f32 %v252, %v274
    %276 = vmatmul.f32.gmra.mxu0 %v188
    %v277 = vpop.f32.mrf.mxu0
    %v278 = vadd.f32 %v252, %v277
    %279 = vmatmul.f32.gmra.mxu0 %v189
    %v280 = vpop.f32.mrf.mxu0
    %v281 = vadd.f32 %v252, %v280
    %282 = vmatmul.f32.gmra.mxu0 %v190
    %v283 = vpop.f32.mrf.mxu0
    %v284 = vadd.f32 %v252, %v283
    %285 = vmatmul.f32.gmra.mxu0 %v191
    %v286 = vpop.f32.mrf.mxu0
    %v287 = vadd.f32 %v252, %v286
    %288 = vmatmul.f32.gmra.mxu0 %v192
    %v289 = vpop.f32.mrf.mxu0
    %v290 = vadd.f32 %v252, %v289
    %291 = vmatmul.f32.gmra.mxu0 %v193
    %v292 = vpop.f32.mrf.mxu0
    %v293 = vadd.f32 %v252, %v292
    %294 = vmatmul.f32.gmra.mxu0 %v194
    %v295 = vpop.f32.mrf.mxu0
    %v296 = vadd.f32 %v252, %v295
    %297 = vmatmul.f32.gmra.mxu0 %v195
    %v298 = vpop.f32.mrf.mxu0
    %v299 = vadd.f32 %v252, %v298
    %300 = vmatmul.f32.gmra.mxu0 %v196
    %v301 = vpop.f32.mrf.mxu0
    %v302 = vadd.f32 %v252, %v301
    %303 = vmatmul.f32.gmra.mxu0 %v197
    %v304 = vpop.f32.mrf.mxu0
    %v305 = vadd.f32 %v252, %v304
    %306 = vmatmul.f32.gmra.mxu0 %v198
    %v307 = vpop.f32.mrf.mxu0
    %v308 = vadd.f32 %v252, %v307
    %309 = vmatmul.f32.gmra.mxu0 %v199
    %v310 = vpop.f32.mrf.mxu0
    %v311 = vadd.f32 %v252, %v310
    %312 = vmatmul.f32.gmra.mxu0 %v200
    %v313 = vpop.f32.mrf.mxu0
    %v314 = vadd.f32 %v252, %v313
    %315 = vmatmul.f32.gmra.mxu0 %v201
    %v316 = vpop.f32.mrf.mxu0
    %v317 = vadd.f32 %v252, %v316
    %318 = vmatmul.f32.gmra.mxu0 %v202
    %v319 = vpop.f32.mrf.mxu0
    %v320 = vadd.f32 %v252, %v319
    %321 = vmatmul.f32.gmra.mxu0 %v203
    %v322 = vpop.f32.mrf.mxu0
    %v323 = vadd.f32 %v252, %v322
    %324 = vmatmul.f32.gmra.mxu0 %v204
    %v325 = vpop.f32.mrf.mxu0
    %v326 = vadd.f32 %v252, %v325
    %327 = vmatmul.f32.gmra.mxu0 %v205
    %v328 = vpop.f32.mrf.mxu0
    %v329 = vadd.f32 %v252, %v328
    %330 = vmatmul.f32.gmra.mxu0 %v206
    %v331 = vpop.f32.mrf.mxu0
    %v332 = vadd.f32 %v252, %v331
    %333 = vmatmul.f32.gmra.mxu0 %v207
    %v334 = vpop.f32.mrf.mxu0
    %v335 = vadd.f32 %v252, %v334
    %336 = vmatmul.f32.gmra.mxu0 %v208
    %v337 = vpop.f32.mrf.mxu0
    %v338 = vadd.f32 %v252, %v337
    %339 = vmatmul.f32.gmra.mxu0 %v209
    %v340 = vpop.f32.mrf.mxu0
    %v341 = vadd.f32 %v252, %v340
    %342 = vmatmul.f32.gmra.mxu0 %v210
    %v343 = vpop.f32.mrf.mxu0
    %v344 = vadd.f32 %v252, %v343
    %345 = vmatmul.f32.gmra.mxu0 %v211
    %v346 = vpop.f32.mrf.mxu0
    %v347 = vadd.f32 %v252, %v346
    %348 = vmatmul.f32.gmra.mxu0 %v212
    %v349 = vpop.f32.mrf.mxu0
    %v350 = vadd.f32 %v252, %v349
    %351 = vmatmul.f32.gmra.mxu0 %v213
    %v352 = vpop.f32.mrf.mxu0
    %v353 = vadd.f32 %v252, %v352
    %354 = vmatmul.f32.gmra.mxu0 %v214
    %v355 = vpop.f32.mrf.mxu0
    %v356 = vadd.f32 %v252, %v355
    %357 = vmatmul.f32.gmra.mxu0 %v215
    %v358 = vpop.f32.mrf.mxu0
    %v359 = vadd.f32 %v252, %v358
    %360 = vmatmul.f32.gmra.mxu0 %v216
    %v361 = vpop.f32.mrf.mxu0
    %v362 = vadd.f32 %v252, %v361
    %363 = vmatmul.f32.gmra.mxu0 %v217
    %v364 = vpop.f32.mrf.mxu0
    %v365 = vadd.f32 %v252, %v364
    %366 = vmatmul.f32.gmra.mxu0 %v218
    %v367 = vpop.f32.mrf.mxu0
    %v368 = vadd.f32 %v252, %v367
    %369 = vmatmul.f32.gmra.mxu0 %v219
    %v370 = vpop.f32.mrf.mxu0
    %v371 = vadd.f32 %v252, %v370
    %372 = vmatmul.f32.gmra.mxu0 %v220
    %v373 = vpop.f32.mrf.mxu0
    %v374 = vadd.f32 %v252, %v373
    %375 = vmatmul.f32.gmra.mxu0 %v221
    %v376 = vpop.f32.mrf.mxu0
    %v377 = vadd.f32 %v252, %v376
    %378 = vmatmul.f32.gmra.mxu0 %v222
    %v379 = vpop.f32.mrf.mxu0
    %v380 = vadd.f32 %v252, %v379
    %381 = vmatmul.f32.gmra.mxu0 %v223
    %v382 = vpop.f32.mrf.mxu0
    %v383 = vadd.f32 %v252, %v382
    %384 = vmatmul.f32.gmra.mxu0 %v224
    %v385 = vpop.f32.mrf.mxu0
    %v386 = vadd.f32 %v252, %v385
    %387 = vmatmul.f32.gmra.mxu0 %v225
    %v388 = vpop.f32.mrf.mxu0
    %v389 = vadd.f32 %v252, %v388
    %390 = vmatmul.f32.gmra.mxu0 %v226
    %v391 = vpop.f32.mrf.mxu0
    %v392 = vadd.f32 %v252, %v391
    %393 = vmatmul.f32.gmra.mxu0 %v227
    %v394 = vpop.f32.mrf.mxu0
    %v395 = vadd.f32 %v252, %v394
    %396 = vmatmul.f32.gmra.mxu0 %v228
    %v397 = vpop.f32.mrf.mxu0
    %v398 = vadd.f32 %v252, %v397
    %399 = vmatmul.f32.gmra.mxu0 %v229
    %v400 = vpop.f32.mrf.mxu0
    %v401 = vadd.f32 %v252, %v400
    %402 = vmatmul.f32.gmra.mxu0 %v230
    %v403 = vpop.f32.mrf.mxu0
    %v404 = vadd.f32 %v252, %v403
    %405 = vmatmul.f32.gmra.mxu0 %v231
    %v406 = vpop.f32.mrf.mxu0
    %v407 = vadd.f32 %v252, %v406
    %408 = vmatmul.f32.gmra.mxu0 %v232
    %v409 = vpop.f32.mrf.mxu0
    %v410 = vadd.f32 %v252, %v409
    %411 = vmatmul.f32.gmra.mxu0 %v233
    %v412 = vpop.f32.mrf.mxu0
    %v413 = vadd.f32 %v252, %v412
    %414 = vdwg.mxu0
    %v415 = vmax.f32 %v272, 0.0
    %v416 = vmax.f32 %v275, 0.0
    %v417 = vmax.f32 %v278, 0.0
    %v418 = vmax.f32 %v281, 0.0
    %v419 = vmax.f32 %v284, 0.0
    %v420 = vmax.f32 %v287, 0.0
    %v421 = vmax.f32 %v290, 0.0
    %v422 = vmax.f32 %v293, 0.0
    %v423 = vmax.f32 %v296, 0.0
    %v424 = vmax.f32 %v299, 0.0
    %v425 = vmax.f32 %v302, 0.0
    %v426 = vmax.f32 %v305, 0.0
    %v427 = vmax.f32 %v308, 0.0
    %v428 = vmax.f32 %v311, 0.0
    %v429 = vmax.f32 %v314, 0.0
    %v430 = vmax.f32 %v317, 0.0
    %v431 = vmax.f32 %v320, 0.0
    %v432 = vmax.f32 %v323, 0.0
    %v433 = vmax.f32 %v326, 0.0
    %v434 = vmax.f32 %v329, 0.0
    %v435 = vmax.f32 %v332, 0.0
    %v436 = vmax.f32 %v335, 0.0
    %v437 = vmax.f32 %v338, 0.0
    %v438 = vmax.f32 %v341, 0.0
    %v439 = vmax.f32 %v344, 0.0
    %v440 = vmax.f32 %v347, 0.0
    %v441 = vmax.f32 %v350, 0.0
    %v442 = vmax.f32 %v353, 0.0
    %v443 = vmax.f32 %v356, 0.0
    %v444 = vmax.f32 %v359, 0.0
    %v445 = vmax.f32 %v362, 0.0
    %v446 = vmax.f32 %v365, 0.0
    %v447 = vmax.f32 %v368, 0.0
    %v448 = vmax.f32 %v371, 0.0
    %v449 = vmax.f32 %v374, 0.0
    %v450 = vmax.f32 %v377, 0.0
    %v451 = vmax.f32 %v380, 0.0
    %v452 = vmax.f32 %v383, 0.0
    %v453 = vmax.f32 %v386, 0.0
    %v454 = vmax.f32 %v389, 0.0
    %v455 = vmax.f32 %v392, 0.0
    %v456 = vmax.f32 %v395, 0.0
    %v457 = vmax.f32 %v398, 0.0
    %v458 = vmax.f32 %v401, 0.0
    %v459 = vmax.f32 %v404, 0.0
    %v460 = vmax.f32 %v407, 0.0
    %v461 = vmax.f32 %v410, 0.0
    %v462 = vmax.f32 %v413, 0.0
    %v463 = vand.u32 2147483647, %v272
    %v464 = vand.u32 2147483647, %v275
    %v465 = vand.u32 2147483647, %v278
    %v466 = vand.u32 2147483647, %v281
    %v467 = vand.u32 2147483647, %v284
    %v468 = vand.u32 2147483647, %v287
    %v469 = vand.u32 2147483647, %v290
    %v470 = vand.u32 2147483647, %v293
    %v471 = vand.u32 2147483647, %v296
    %v472 = vand.u32 2147483647, %v299
    %v473 = vand.u32 2147483647, %v302
    %v474 = vand.u32 2147483647, %v305
    %v475 = vand.u32 2147483647, %v308
    %v476 = vand.u32 2147483647, %v311
    %v477 = vand.u32 2147483647, %v314
    %v478 = vand.u32 2147483647, %v317
    %v479 = vand.u32 2147483647, %v320
    %v480 = vand.u32 2147483647, %v323
    %v481 = vand.u32 2147483647, %v326
    %v482 = vand.u32 2147483647, %v329
    %v483 = vand.u32 2147483647, %v332
    %v484 = vand.u32 2147483647, %v335
    %v485 = vand.u32 2147483647, %v338
    %v486 = vand.u32 2147483647, %v341
    %v487 = vand.u32 2147483647, %v344
    %v488 = vand.u32 2147483647, %v347
    %v489 = vand.u32 2147483647, %v350
    %v490 = vand.u32 2147483647, %v353
    %v491 = vand.u32 2147483647, %v356
    %v492 = vand.u32 2147483647, %v359
    %v493 = vand.u32 2147483647, %v362
    %v494 = vand.u32 2147483647, %v365
    %v495 = vand.u32 2147483647, %v368
    %v496 = vand.u32 2147483647, %v371
    %v497 = vand.u32 2147483647, %v374
    %v498 = vand.u32 2147483647, %v377
    %v499 = vand.u32 2147483647, %v380
    %v500 = vand.u32 2147483647, %v383
    %v501 = vand.u32 2147483647, %v386
    %v502 = vand.u32 2147483647, %v389
    %v503 = vand.u32 2147483647, %v392
    %v504 = vand.u32 2147483647, %v395
    %v505 = vand.u32 2147483647, %v398
    %v506 = vand.u32 2147483647, %v401
    %v507 = vand.u32 2147483647, %v404
    %v508 = vand.u32 2147483647, %v407
    %v509 = vand.u32 2147483647, %v410
    %v510 = vand.u32 2147483647, %v413
    %v511 = vsub.f32 0.0, %v463
    %v512 = vsub.f32 0.0, %v464
    %v513 = vsub.f32 0.0, %v465
    %v514 = vsub.f32 0.0, %v466
    %v515 = vsub.f32 0.0, %v467
    %v516 = vsub.f32 0.0, %v468
    %v517 = vsub.f32 0.0, %v469
    %v518 = vsub.f32 0.0, %v470
    %v519 = vsub.f32 0.0, %v471
    %v520 = vsub.f32 0.0, %v472
    %v521 = vsub.f32 0.0, %v473
    %v522 = vsub.f32 0.0, %v474
    %v523 = vsub.f32 0.0, %v475
    %v524 = vsub.f32 0.0, %v476
    %v525 = vsub.f32 0.0, %v477
    %v526 = vsub.f32 0.0, %v478
    %v527 = vsub.f32 0.0, %v479
    %v528 = vsub.f32 0.0, %v480
    %v529 = vsub.f32 0.0, %v481
    %v530 = vsub.f32 0.0, %v482
    %v531 = vsub.f32 0.0, %v483
    %v532 = vsub.f32 0.0, %v484
    %v533 = vsub.f32 0.0, %v485
    %v534 = vsub.f32 0.0, %v486
    %v535 = vsub.f32 0.0, %v487
    %v536 = vsub.f32 0.0, %v488
    %v537 = vsub.f32 0.0, %v489
    %v538 = vsub.f32 0.0, %v490
    %v539 = vsub.f32 0.0, %v491
    %v540 = vsub.f32 0.0, %v492
    %v541 = vsub.f32 0.0, %v493
    %v542 = vsub.f32 0.0, %v494
    %v543 = vsub.f32 0.0, %v495
    %v544 = vsub.f32 0.0, %v496
    %v545 = vsub.f32 0.0, %v497
    %v546 = vsub.f32 0.0, %v498
    %v547 = vsub.f32 0.0, %v499
    %v548 = vsub.f32 0.0, %v500
    %v549 = vsub.f32 0.0, %v501
    %v550 = vsub.f32 0.0, %v502
    %v551 = vsub.f32 0.0, %v503
    %v552 = vsub.f32 0.0, %v504
    %v553 = vsub.f32 0.0, %v505
    %v554 = vsub.f32 0.0, %v506
    %v555 = vsub.f32 0.0, %v507
    %v556 = vsub.f32 0.0, %v508
    %v557 = vsub.f32 0.0, %v509
    %v558 = vsub.f32 0.0, %v510
    %v559 = vmul.f32 %v511, 1.442695
    %v560 = vpow.pop %v559
    %v561 = vmul.f32 %v512, 1.442695
    %v562 = vpow.pop %v561
    %v563 = vmul.f32 %v513, 1.442695
    %v564 = vpow.pop %v563
    %v565 = vmul.f32 %v514, 1.442695
    %v566 = vpow.pop %v565
    %v567 = vmul.f32 %v515, 1.442695
    %v568 = vpow.pop %v567
    %v569 = vmul.f32 %v516, 1.442695
    %v570 = vpow.pop %v569
    %v571 = vmul.f32 %v517, 1.442695
    %v572 = vpow.pop %v571
    %v573 = vmul.f32 %v518, 1.442695
    %v574 = vpow.pop %v573
    %v575 = vmul.f32 %v519, 1.442695
    %v576 = vpow.pop %v575
    %v577 = vmul.f32 %v520, 1.442695
    %v578 = vpow.pop %v577
    %v579 = vmul.f32 %v521, 1.442695
    %v580 = vpow.pop %v579
    %v581 = vmul.f32 %v522, 1.442695
    %v582 = vpow.pop %v581
    %v583 = vmul.f32 %v523, 1.442695
    %v584 = vpow.pop %v583
    %v585 = vmul.f32 %v524, 1.442695
    %v586 = vpow.pop %v585
    %v587 = vmul.f32 %v525, 1.442695
    %v588 = vpow.pop %v587
    %v589 = vmul.f32 %v526, 1.442695
    %v590 = vpow.pop %v589
    %v591 = vmul.f32 %v527, 1.442695
    %v592 = vpow.pop %v591
    %v593 = vmul.f32 %v528, 1.442695
    %v594 = vpow.pop %v593
    %v595 = vmul.f32 %v529, 1.442695
    %v596 = vpow.pop %v595
    %v597 = vmul.f32 %v530, 1.442695
    %v598 = vpow.pop %v597
    %v599 = vmul.f32 %v531, 1.442695
    %v600 = vpow.pop %v599
    %v601 = vmul.f32 %v532, 1.442695
    %v602 = vpow.pop %v601
    %v603 = vmul.f32 %v533, 1.442695
    %v604 = vpow.pop %v603
    %v605 = vmul.f32 %v534, 1.442695
    %v606 = vpow.pop %v605
    %v607 = vmul.f32 %v535, 1.442695
    %v608 = vpow.pop %v607
    %v609 = vmul.f32 %v536, 1.442695
    %v610 = vpow.pop %v609
    %v611 = vmul.f32 %v537, 1.442695
    %v612 = vpow.pop %v611
    %v613 = vmul.f32 %v538, 1.442695
    %v614 = vpow.pop %v613
    %v615 = vmul.f32 %v539, 1.442695
    %v616 = vpow.pop %v615
    %v617 = vmul.f32 %v540, 1.442695
    %v618 = vpow.pop %v617
    %v619 = vmul.f32 %v541, 1.442695
    %v620 = vpow.pop %v619
    %v621 = vmul.f32 %v542, 1.442695
    %v622 = vpow.pop %v621
    %v623 = vmul.f32 %v543, 1.442695
    %v624 = vpow.pop %v623
    %v625 = vmul.f32 %v544, 1.442695
    %v626 = vpow.pop %v625
    %v627 = vmul.f32 %v545, 1.442695
    %v628 = vpow.pop %v627
    %v629 = vmul.f32 %v546, 1.442695
    %v630 = vpow.pop %v629
    %v631 = vmul.f32 %v547, 1.442695
    %v632 = vpow.pop %v631
    %v633 = vmul.f32 %v548, 1.442695
    %v634 = vpow.pop %v633
    %v635 = vmul.f32 %v549, 1.442695
    %v636 = vpow.pop %v635
    %v637 = vmul.f32 %v550, 1.442695
    %v638 = vpow.pop %v637
    %v639 = vmul.f32 %v551, 1.442695
    %v640 = vpow.pop %v639
    %v641 = vmul.f32 %v552, 1.442695
    %v642 = vpow.pop %v641
    %v643 = vmul.f32 %v553, 1.442695
    %v644 = vpow.pop %v643
    %v645 = vmul.f32 %v554, 1.442695
    %v646 = vpow.pop %v645
    %v647 = vmul.f32 %v555, 1.442695
    %v648 = vpow.pop %v647
    %v649 = vmul.f32 %v556, 1.442695
    %v650 = vpow.pop %v649
    %v651 = vmul.f32 %v557, 1.442695
    %v652 = vpow.pop %v651
    %v653 = vmul.f32 %v558, 1.442695
    %v654 = vpow.pop %v653
    %v655 = vadd.f32 %v560, 1.0
    %v656 = vlog2.pop %v655
    %v657 = vmul.f32 %v656, 0.6931472
    %v658 = vmul.f32 -0.5, %v560
    %v659 = vadd.f32 %v658, 1.0
    %v660 = vmul.f32 %v659, %v560
    %v661 = vand.u32 2147483647, %v560
    %vm662 = vcmp.lt.f32.partialorder %v661, 0.0004427343
    %v663 = vsel %vm662, %v660, %v657
    %v664 = vadd.f32 %v562, 1.0
    %v665 = vlog2.pop %v664
    %v666 = vmul.f32 %v665, 0.6931472
    %v667 = vmul.f32 -0.5, %v562
    %v668 = vadd.f32 %v667, 1.0
    %v669 = vmul.f32 %v668, %v562
    %v670 = vand.u32 2147483647, %v562
    %vm671 = vcmp.lt.f32.partialorder %v670, 0.0004427343
    %v672 = vsel %vm671, %v669, %v666
    %v673 = vadd.f32 %v564, 1.0
    %v674 = vlog2.pop %v673
    %v675 = vmul.f32 %v674, 0.6931472
    %v676 = vmul.f32 -0.5, %v564
    %v677 = vadd.f32 %v676, 1.0
    %v678 = vmul.f32 %v677, %v564
    %v679 = vand.u32 2147483647, %v564
    %vm680 = vcmp.lt.f32.partialorder %v679, 0.0004427343
    %v681 = vsel %vm680, %v678, %v675
    %v682 = vadd.f32 %v566, 1.0
    %v683 = vlog2.pop %v682
    %v684 = vmul.f32 %v683, 0.6931472
    %v685 = vmul.f32 -0.5, %v566
    %v686 = vadd.f32 %v685, 1.0
    %v687 = vmul.f32 %v686, %v566
    %v688 = vand.u32 2147483647, %v566
    %vm689 = vcmp.lt.f32.partialorder %v688, 0.0004427343
    %v690 = vsel %vm689, %v687, %v684
    %v691 = vadd.f32 %v568, 1.0
    %v692 = vlog2.pop %v691
    %v693 = vmul.f32 %v692, 0.6931472
    %v694 = vmul.f32 -0.5, %v568
    %v695 = vadd.f32 %v694, 1.0
    %v696 = vmul.f32 %v695, %v568
    %v697 = vand.u32 2147483647, %v568
    %vm698 = vcmp.lt.f32.partialorder %v697, 0.0004427343
    %v699 = vsel %vm698, %v696, %v693
    %v700 = vadd.f32 %v570, 1.0
    %v701 = vlog2.pop %v700
    %v702 = vmul.f32 %v701, 0.6931472
    %v703 = vmul.f32 -0.5, %v570
    %v704 = vadd.f32 %v703, 1.0
    %v705 = vmul.f32 %v704, %v570
    %v706 = vand.u32 2147483647, %v570
    %vm707 = vcmp.lt.f32.partialorder %v706, 0.0004427343
    %v708 = vsel %vm707, %v705, %v702
    %v709 = vadd.f32 %v572, 1.0
    %v710 = vlog2.pop %v709
    %v711 = vmul.f32 %v710, 0.6931472
    %v712 = vmul.f32 -0.5, %v572
    %v713 = vadd.f32 %v712, 1.0
    %v714 = vmul.f32 %v713, %v572
    %v715 = vand.u32 2147483647, %v572
    %vm716 = vcmp.lt.f32.partialorder %v715, 0.0004427343
    %v717 = vsel %vm716, %v714, %v711
    %v718 = vadd.f32 %v574, 1.0
    %v719 = vlog2.pop %v718
    %v720 = vmul.f32 %v719, 0.6931472
    %v721 = vmul.f32 -0.5, %v574
    %v722 = vadd.f32 %v721, 1.0
    %v723 = vmul.f32 %v722, %v574
    %v724 = vand.u32 2147483647, %v574
    %vm725 = vcmp.lt.f32.partialorder %v724, 0.0004427343
    %v726 = vsel %vm725, %v723, %v720
    %v727 = vadd.f32 %v576, 1.0
    %v728 = vlog2.pop %v727
    %v729 = vmul.f32 %v728, 0.6931472
    %v730 = vmul.f32 -0.5, %v576
    %v731 = vadd.f32 %v730, 1.0
    %v732 = vmul.f32 %v731, %v576
    %v733 = vand.u32 2147483647, %v576
    %vm734 = vcmp.lt.f32.partialorder %v733, 0.0004427343
    %v735 = vsel %vm734, %v732, %v729
    %v736 = vadd.f32 %v578, 1.0
    %v737 = vlog2.pop %v736
    %v738 = vmul.f32 %v737, 0.6931472
    %v739 = vmul.f32 -0.5, %v578
    %v740 = vadd.f32 %v739, 1.0
    %v741 = vmul.f32 %v740, %v578
    %v742 = vand.u32 2147483647, %v578
    %vm743 = vcmp.lt.f32.partialorder %v742, 0.0004427343
    %v744 = vsel %vm743, %v741, %v738
    %v745 = vadd.f32 %v580, 1.0
    %v746 = vlog2.pop %v745
    %v747 = vmul.f32 %v746, 0.6931472
    %v748 = vmul.f32 -0.5, %v580
    %v749 = vadd.f32 %v748, 1.0
    %v750 = vmul.f32 %v749, %v580
    %v751 = vand.u32 2147483647, %v580
    %vm752 = vcmp.lt.f32.partialorder %v751, 0.0004427343
    %v753 = vsel %vm752, %v750, %v747
    %v754 = vadd.f32 %v582, 1.0
    %v755 = vlog2.pop %v754
    %v756 = vmul.f32 %v755, 0.6931472
    %v757 = vmul.f32 -0.5, %v582
    %v758 = vadd.f32 %v757, 1.0
    %v759 = vmul.f32 %v758, %v582
    %v760 = vand.u32 2147483647, %v582
    %vm761 = vcmp.lt.f32.partialorder %v760, 0.0004427343
    %v762 = vsel %vm761, %v759, %v756
    %v763 = vadd.f32 %v584, 1.0
    %v764 = vlog2.pop %v763
    %v765 = vmul.f32 %v764, 0.6931472
    %v766 = vmul.f32 -0.5, %v584
    %v767 = vadd.f32 %v766, 1.0
    %v768 = vmul.f32 %v767, %v584
    %v769 = vand.u32 2147483647, %v584
    %vm770 = vcmp.lt.f32.partialorder %v769, 0.0004427343
    %v771 = vsel %vm770, %v768, %v765
    %v772 = vadd.f32 %v586, 1.0
    %v773 = vlog2.pop %v772
    %v774 = vmul.f32 %v773, 0.6931472
    %v775 = vmul.f32 -0.5, %v586
    %v776 = vadd.f32 %v775, 1.0
    %v777 = vmul.f32 %v776, %v586
    %v778 = vand.u32 2147483647, %v586
    %vm779 = vcmp.lt.f32.partialorder %v778, 0.0004427343
    %v780 = vsel %vm779, %v777, %v774
    %v781 = vadd.f32 %v588, 1.0
    %v782 = vlog2.pop %v781
    %v783 = vmul.f32 %v782, 0.6931472
    %v784 = vmul.f32 -0.5, %v588
    %v785 = vadd.f32 %v784, 1.0
    %v786 = vmul.f32 %v785, %v588
    %v787 = vand.u32 2147483647, %v588
    %vm788 = vcmp.lt.f32.partialorder %v787, 0.0004427343
    %v789 = vsel %vm788, %v786, %v783
    %v790 = vadd.f32 %v590, 1.0
    %v791 = vlog2.pop %v790
    %v792 = vmul.f32 %v791, 0.6931472
    %v793 = vmul.f32 -0.5, %v590
    %v794 = vadd.f32 %v793, 1.0
    %v795 = vmul.f32 %v794, %v590
    %v796 = vand.u32 2147483647, %v590
    %vm797 = vcmp.lt.f32.partialorder %v796, 0.0004427343
    %v798 = vsel %vm797, %v795, %v792
    %v799 = vadd.f32 %v592, 1.0
    %v800 = vlog2.pop %v799
    %v801 = vmul.f32 %v800, 0.6931472
    %v802 = vmul.f32 -0.5, %v592
    %v803 = vadd.f32 %v802, 1.0
    %v804 = vmul.f32 %v803, %v592
    %v805 = vand.u32 2147483647, %v592
    %vm806 = vcmp.lt.f32.partialorder %v805, 0.0004427343
    %v807 = vsel %vm806, %v804, %v801
    %v808 = vadd.f32 %v594, 1.0
    %v809 = vlog2.pop %v808
    %v810 = vmul.f32 %v809, 0.6931472
    %v811 = vmul.f32 -0.5, %v594
    %v812 = vadd.f32 %v811, 1.0
    %v813 = vmul.f32 %v812, %v594
    %v814 = vand.u32 2147483647, %v594
    %vm815 = vcmp.lt.f32.partialorder %v814, 0.0004427343
    %v816 = vsel %vm815, %v813, %v810
    %v817 = vadd.f32 %v596, 1.0
    %v818 = vlog2.pop %v817
    %v819 = vmul.f32 %v818, 0.6931472
    %v820 = vmul.f32 -0.5, %v596
    %v821 = vadd.f32 %v820, 1.0
    %v822 = vmul.f32 %v821, %v596
    %v823 = vand.u32 2147483647, %v596
    %vm824 = vcmp.lt.f32.partialorder %v823, 0.0004427343
    %v825 = vsel %vm824, %v822, %v819
    %v826 = vadd.f32 %v598, 1.0
    %v827 = vlog2.pop %v826
    %v828 = vmul.f32 %v827, 0.6931472
    %v829 = vmul.f32 -0.5, %v598
    %v830 = vadd.f32 %v829, 1.0
    %v831 = vmul.f32 %v830, %v598
    %v832 = vand.u32 2147483647, %v598
    %vm833 = vcmp.lt.f32.partialorder %v832, 0.0004427343
    %v834 = vsel %vm833, %v831, %v828
    %v835 = vadd.f32 %v600, 1.0
    %v836 = vlog2.pop %v835
    %v837 = vmul.f32 %v836, 0.6931472
    %v838 = vmul.f32 -0.5, %v600
    %v839 = vadd.f32 %v838, 1.0
    %v840 = vmul.f32 %v839, %v600
    %v841 = vand.u32 2147483647, %v600
    %vm842 = vcmp.lt.f32.partialorder %v841, 0.0004427343
    %v843 = vsel %vm842, %v840, %v837
    %v844 = vadd.f32 %v602, 1.0
    %v845 = vlog2.pop %v844
    %v846 = vmul.f32 %v845, 0.6931472
    %v847 = vmul.f32 -0.5, %v602
    %v848 = vadd.f32 %v847, 1.0
    %v849 = vmul.f32 %v848, %v602
    %v850 = vand.u32 2147483647, %v602
    %vm851 = vcmp.lt.f32.partialorder %v850, 0.0004427343
    %v852 = vsel %vm851, %v849, %v846
    %v853 = vadd.f32 %v604, 1.0
    %v854 = vlog2.pop %v853
    %v855 = vmul.f32 %v854, 0.6931472
    %v856 = vmul.f32 -0.5, %v604
    %v857 = vadd.f32 %v856, 1.0
    %v858 = vmul.f32 %v857, %v604
    %v859 = vand.u32 2147483647, %v604
    %vm860 = vcmp.lt.f32.partialorder %v859, 0.0004427343
    %v861 = vsel %vm860, %v858, %v855
    %v862 = vadd.f32 %v606, 1.0
    %v863 = vlog2.pop %v862
    %v864 = vmul.f32 %v863, 0.6931472
    %v865 = vmul.f32 -0.5, %v606
    %v866 = vadd.f32 %v865, 1.0
    %v867 = vmul.f32 %v866, %v606
    %v868 = vand.u32 2147483647, %v606
    %vm869 = vcmp.lt.f32.partialorder %v868, 0.0004427343
    %v870 = vsel %vm869, %v867, %v864
    %v871 = vadd.f32 %v608, 1.0
    %v872 = vlog2.pop %v871
    %v873 = vmul.f32 %v872, 0.6931472
    %v874 = vmul.f32 -0.5, %v608
    %v875 = vadd.f32 %v874, 1.0
    %v876 = vmul.f32 %v875, %v608
    %v877 = vand.u32 2147483647, %v608
    %vm878 = vcmp.lt.f32.partialorder %v877, 0.0004427343
    %v879 = vsel %vm878, %v876, %v873
    %v880 = vadd.f32 %v610, 1.0
    %v881 = vlog2.pop %v880
    %v882 = vmul.f32 %v881, 0.6931472
    %v883 = vmul.f32 -0.5, %v610
    %v884 = vadd.f32 %v883, 1.0
    %v885 = vmul.f32 %v884, %v610
    %v886 = vand.u32 2147483647, %v610
    %vm887 = vcmp.lt.f32.partialorder %v886, 0.0004427343
    %v888 = vsel %vm887, %v885, %v882
    %v889 = vadd.f32 %v612, 1.0
    %v890 = vlog2.pop %v889
    %v891 = vmul.f32 %v890, 0.6931472
    %v892 = vmul.f32 -0.5, %v612
    %v893 = vadd.f32 %v892, 1.0
    %v894 = vmul.f32 %v893, %v612
    %v895 = vand.u32 2147483647, %v612
    %vm896 = vcmp.lt.f32.partialorder %v895, 0.0004427343
    %v897 = vsel %vm896, %v894, %v891
    %v898 = vadd.f32 %v614, 1.0
    %v899 = vlog2.pop %v898
    %v900 = vmul.f32 %v899, 0.6931472
    %v901 = vmul.f32 -0.5, %v614
    %v902 = vadd.f32 %v901, 1.0
    %v903 = vmul.f32 %v902, %v614
    %v904 = vand.u32 2147483647, %v614
    %vm905 = vcmp.lt.f32.partialorder %v904, 0.0004427343
    %v906 = vsel %vm905, %v903, %v900
    %v907 = vadd.f32 %v616, 1.0
    %v908 = vlog2.pop %v907
    %v909 = vmul.f32 %v908, 0.6931472
    %v910 = vmul.f32 -0.5, %v616
    %v911 = vadd.f32 %v910, 1.0
    %v912 = vmul.f32 %v911, %v616
    %v913 = vand.u32 2147483647, %v616
    %vm914 = vcmp.lt.f32.partialorder %v913, 0.0004427343
    %v915 = vsel %vm914, %v912, %v909
    %v916 = vadd.f32 %v618, 1.0
    %v917 = vlog2.pop %v916
    %v918 = vmul.f32 %v917, 0.6931472
    %v919 = vmul.f32 -0.5, %v618
    %v920 = vadd.f32 %v919, 1.0
    %v921 = vmul.f32 %v920, %v618
    %v922 = vand.u32 2147483647, %v618
    %vm923 = vcmp.lt.f32.partialorder %v922, 0.0004427343
    %v924 = vsel %vm923, %v921, %v918
    %v925 = vadd.f32 %v620, 1.0
    %v926 = vlog2.pop %v925
    %v927 = vmul.f32 %v926, 0.6931472
    %v928 = vmul.f32 -0.5, %v620
    %v929 = vadd.f32 %v928, 1.0
    %v930 = vmul.f32 %v929, %v620
    %v931 = vand.u32 2147483647, %v620
    %vm932 = vcmp.lt.f32.partialorder %v931, 0.0004427343
    %v933 = vsel %vm932, %v930, %v927
    %v934 = vadd.f32 %v622, 1.0
    %v935 = vlog2.pop %v934
    %v936 = vmul.f32 %v935, 0.6931472
    %v937 = vmul.f32 -0.5, %v622
    %v938 = vadd.f32 %v937, 1.0
    %v939 = vmul.f32 %v938, %v622
    %v940 = vand.u32 2147483647, %v622
    %vm941 = vcmp.lt.f32.partialorder %v940, 0.0004427343
    %v942 = vsel %vm941, %v939, %v936
    %v943 = vadd.f32 %v624, 1.0
    %v944 = vlog2.pop %v943
    %v945 = vmul.f32 %v944, 0.6931472
    %v946 = vmul.f32 -0.5, %v624
    %v947 = vadd.f32 %v946, 1.0
    %v948 = vmul.f32 %v947, %v624
    %v949 = vand.u32 2147483647, %v624
    %vm950 = vcmp.lt.f32.partialorder %v949, 0.0004427343
    %v951 = vsel %vm950, %v948, %v945
    %v952 = vadd.f32 %v626, 1.0
    %v953 = vlog2.pop %v952
    %v954 = vmul.f32 %v953, 0.6931472
    %v955 = vmul.f32 -0.5, %v626
    %v956 = vadd.f32 %v955, 1.0
    %v957 = vmul.f32 %v956, %v626
    %v958 = vand.u32 2147483647, %v626
    %vm959 = vcmp.lt.f32.partialorder %v958, 0.0004427343
    %v960 = vsel %vm959, %v957, %v954
    %v961 = vadd.f32 %v628, 1.0
    %v962 = vlog2.pop %v961
    %v963 = vmul.f32 %v962, 0.6931472
    %v964 = vmul.f32 -0.5, %v628
    %v965 = vadd.f32 %v964, 1.0
    %v966 = vmul.f32 %v965, %v628
    %v967 = vand.u32 2147483647, %v628
    %vm968 = vcmp.lt.f32.partialorder %v967, 0.0004427343
    %v969 = vsel %vm968, %v966, %v963
    %v970 = vadd.f32 %v630, 1.0
    %v971 = vlog2.pop %v970
    %v972 = vmul.f32 %v971, 0.6931472
    %v973 = vmul.f32 -0.5, %v630
    %v974 = vadd.f32 %v973, 1.0
    %v975 = vmul.f32 %v974, %v630
    %v976 = vand.u32 2147483647, %v630
    %vm977 = vcmp.lt.f32.partialorder %v976, 0.0004427343
    %v978 = vsel %vm977, %v975, %v972
    %v979 = vadd.f32 %v632, 1.0
    %v980 = vlog2.pop %v979
    %v981 = vmul.f32 %v980, 0.6931472
    %v982 = vmul.f32 -0.5, %v632
    %v983 = vadd.f32 %v982, 1.0
    %v984 = vmul.f32 %v983, %v632
    %v985 = vand.u32 2147483647, %v632
    %vm986 = vcmp.lt.f32.partialorder %v985, 0.0004427343
    %v987 = vsel %vm986, %v984, %v981
    %v988 = vadd.f32 %v634, 1.0
    %v989 = vlog2.pop %v988
    %v990 = vmul.f32 %v989, 0.6931472
    %v991 = vmul.f32 -0.5, %v634
    %v992 = vadd.f32 %v991, 1.0
    %v993 = vmul.f32 %v992, %v634
    %v994 = vand.u32 2147483647, %v634
    %vm995 = vcmp.lt.f32.partialorder %v994, 0.0004427343
    %v996 = vsel %vm995, %v993, %v990
    %v997 = vadd.f32 %v636, 1.0
    %v998 = vlog2.pop %v997
    %v999 = vmul.f32 %v998, 0.6931472
    %v1000 = vmul.f32 -0.5, %v636
    %v1001 = vadd.f32 %v1000, 1.0
    %v1002 = vmul.f32 %v1001, %v636
    %v1003 = vand.u32 2147483647, %v636
    %vm1004 = vcmp.lt.f32.partialorder %v1003, 0.0004427343
    %v1005 = vsel %vm1004, %v1002, %v999
    %v1006 = vadd.f32 %v638, 1.0
    %v1007 = vlog2.pop %v1006
    %v1008 = vmul.f32 %v1007, 0.6931472
    %v1009 = vmul.f32 -0.5, %v638
    %v1010 = vadd.f32 %v1009, 1.0
    %v1011 = vmul.f32 %v1010, %v638
    %v1012 = vand.u32 2147483647, %v638
    %vm1013 = vcmp.lt.f32.partialorder %v1012, 0.0004427343
    %v1014 = vsel %vm1013, %v1011, %v1008
    %v1015 = vadd.f32 %v640, 1.0
    %v1016 = vlog2.pop %v1015
    %v1017 = vmul.f32 %v1016, 0.6931472
    %v1018 = vmul.f32 -0.5, %v640
    %v1019 = vadd.f32 %v1018, 1.0
    %v1020 = vmul.f32 %v1019, %v640
    %v1021 = vand.u32 2147483647, %v640
    %vm1022 = vcmp.lt.f32.partialorder %v1021, 0.0004427343
    %v1023 = vsel %vm1022, %v1020, %v1017
    %v1024 = vadd.f32 %v642, 1.0
    %v1025 = vlog2.pop %v1024
    %v1026 = vmul.f32 %v1025, 0.6931472
    %v1027 = vmul.f32 -0.5, %v642
    %v1028 = vadd.f32 %v1027, 1.0
    %v1029 = vmul.f32 %v1028, %v642
    %v1030 = vand.u32 2147483647, %v642
    %vm1031 = vcmp.lt.f32.partialorder %v1030, 0.0004427343
    %v1032 = vsel %vm1031, %v1029, %v1026
    %v1033 = vadd.f32 %v644, 1.0
    %v1034 = vlog2.pop %v1033
    %v1035 = vmul.f32 %v1034, 0.6931472
    %v1036 = vmul.f32 -0.5, %v644
    %v1037 = vadd.f32 %v1036, 1.0
    %v1038 = vmul.f32 %v1037, %v644
    %v1039 = vand.u32 2147483647, %v644
    %vm1040 = vcmp.lt.f32.partialorder %v1039, 0.0004427343
    %v1041 = vsel %vm1040, %v1038, %v1035
    %v1042 = vadd.f32 %v646, 1.0
    %v1043 = vlog2.pop %v1042
    %v1044 = vmul.f32 %v1043, 0.6931472
    %v1045 = vmul.f32 -0.5, %v646
    %v1046 = vadd.f32 %v1045, 1.0
    %v1047 = vmul.f32 %v1046, %v646
    %v1048 = vand.u32 2147483647, %v646
    %vm1049 = vcmp.lt.f32.partialorder %v1048, 0.0004427343
    %v1050 = vsel %vm1049, %v1047, %v1044
    %v1051 = vadd.f32 %v648, 1.0
    %v1052 = vlog2.pop %v1051
    %v1053 = vmul.f32 %v1052, 0.6931472
    %v1054 = vmul.f32 -0.5, %v648
    %v1055 = vadd.f32 %v1054, 1.0
    %v1056 = vmul.f32 %v1055, %v648
    %v1057 = vand.u32 2147483647, %v648
    %vm1058 = vcmp.lt.f32.partialorder %v1057, 0.0004427343
    %v1059 = vsel %vm1058, %v1056, %v1053
    %v1060 = vadd.f32 %v650, 1.0
    %v1061 = vlog2.pop %v1060
    %v1062 = vmul.f32 %v1061, 0.6931472
    %v1063 = vmul.f32 -0.5, %v650
    %v1064 = vadd.f32 %v1063, 1.0
    %v1065 = vmul.f32 %v1064, %v650
    %v1066 = vand.u32 2147483647, %v650
    %vm1067 = vcmp.lt.f32.partialorder %v1066, 0.0004427343
    %v1068 = vsel %vm1067, %v1065, %v1062
    %v1069 = vadd.f32 %v652, 1.0
    %v1070 = vlog2.pop %v1069
    %v1071 = vmul.f32 %v1070, 0.6931472
    %v1072 = vmul.f32 -0.5, %v652
    %v1073 = vadd.f32 %v1072, 1.0
    %v1074 = vmul.f32 %v1073, %v652
    %v1075 = vand.u32 2147483647, %v652
    %vm1076 = vcmp.lt.f32.partialorder %v1075, 0.0004427343
    %v1077 = vsel %vm1076, %v1074, %v1071
    %v1078 = vadd.f32 %v654, 1.0
    %v1079 = vlog2.pop %v1078
    %v1080 = vmul.f32 %v1079, 0.6931472
    %v1081 = vmul.f32 -0.5, %v654
    %v1082 = vadd.f32 %v1081, 1.0
    %v1083 = vmul.f32 %v1082, %v654
    %v1084 = vand.u32 2147483647, %v654
    %vm1085 = vcmp.lt.f32.partialorder %v1084, 0.0004427343
    %v1086 = vsel %vm1085, %v1083, %v1080
    %v1087 = vadd.f32 %v415, %v663
    %v1088 = vadd.f32 %v416, %v672
    %v1089 = vadd.f32 %v417, %v681
    %v1090 = vadd.f32 %v418, %v690
    %v1091 = vadd.f32 %v419, %v699
    %v1092 = vadd.f32 %v420, %v708
    %v1093 = vadd.f32 %v421, %v717
    %v1094 = vadd.f32 %v422, %v726
    %v1095 = vadd.f32 %v423, %v735
    %v1096 = vadd.f32 %v424, %v744
    %v1097 = vadd.f32 %v425, %v753
    %v1098 = vadd.f32 %v426, %v762
    %v1099 = vadd.f32 %v427, %v771
    %v1100 = vadd.f32 %v428, %v780
    %v1101 = vadd.f32 %v429, %v789
    %v1102 = vadd.f32 %v430, %v798
    %v1103 = vadd.f32 %v431, %v807
    %v1104 = vadd.f32 %v432, %v816
    %v1105 = vadd.f32 %v433, %v825
    %v1106 = vadd.f32 %v434, %v834
    %v1107 = vadd.f32 %v435, %v843
    %v1108 = vadd.f32 %v436, %v852
    %v1109 = vadd.f32 %v437, %v861
    %v1110 = vadd.f32 %v438, %v870
    %v1111 = vadd.f32 %v439, %v879
    %v1112 = vadd.f32 %v440, %v888
    %v1113 = vadd.f32 %v441, %v897
    %v1114 = vadd.f32 %v442, %v906
    %v1115 = vadd.f32 %v443, %v915
    %v1116 = vadd.f32 %v444, %v924
    %v1117 = vadd.f32 %v445, %v933
    %v1118 = vadd.f32 %v446, %v942
    %v1119 = vadd.f32 %v447, %v951
    %v1120 = vadd.f32 %v448, %v960
    %v1121 = vadd.f32 %v449, %v969
    %v1122 = vadd.f32 %v450, %v978
    %v1123 = vadd.f32 %v451, %v987
    %v1124 = vadd.f32 %v452, %v996
    %v1125 = vadd.f32 %v453, %v1005
    %v1126 = vadd.f32 %v454, %v1014
    %v1127 = vadd.f32 %v455, %v1023
    %v1128 = vadd.f32 %v456, %v1032
    %v1129 = vadd.f32 %v457, %v1041
    %v1130 = vadd.f32 %v458, %v1050
    %v1131 = vadd.f32 %v459, %v1059
    %v1132 = vadd.f32 %v460, %v1068
    %v1133 = vadd.f32 %v461, %v1077
    %v1134 = vadd.f32 %v462, %v1086
    %v1135 = vsub.f32 %v1087, 0.6931472
    %v1136 = vsub.f32 %v1088, 0.6931472
    %v1137 = vsub.f32 %v1089, 0.6931472
    %v1138 = vsub.f32 %v1090, 0.6931472
    %v1139 = vsub.f32 %v1091, 0.6931472
    %v1140 = vsub.f32 %v1092, 0.6931472
    %v1141 = vsub.f32 %v1093, 0.6931472
    %v1142 = vsub.f32 %v1094, 0.6931472
    %v1143 = vsub.f32 %v1095, 0.6931472
    %v1144 = vsub.f32 %v1096, 0.6931472
    %v1145 = vsub.f32 %v1097, 0.6931472
    %v1146 = vsub.f32 %v1098, 0.6931472
    %v1147 = vsub.f32 %v1099, 0.6931472
    %v1148 = vsub.f32 %v1100, 0.6931472
    %v1149 = vsub.f32 %v1101, 0.6931472
    %v1150 = vsub.f32 %v1102, 0.6931472
    %v1151 = vsub.f32 %v1103, 0.6931472
    %v1152 = vsub.f32 %v1104, 0.6931472
    %v1153 = vsub.f32 %v1105, 0.6931472
    %v1154 = vsub.f32 %v1106, 0.6931472
    %v1155 = vsub.f32 %v1107, 0.6931472
    %v1156 = vsub.f32 %v1108, 0.6931472
    %v1157 = vsub.f32 %v1109, 0.6931472
    %v1158 = vsub.f32 %v1110, 0.6931472
    %v1159 = vsub.f32 %v1111, 0.6931472
    %v1160 = vsub.f32 %v1112, 0.6931472
    %v1161 = vsub.f32 %v1113, 0.6931472
    %v1162 = vsub.f32 %v1114, 0.6931472
    %v1163 = vsub.f32 %v1115, 0.6931472
    %v1164 = vsub.f32 %v1116, 0.6931472
    %v1165 = vsub.f32 %v1117, 0.6931472
    %v1166 = vsub.f32 %v1118, 0.6931472
    %v1167 = vsub.f32 %v1119, 0.6931472
    %v1168 = vsub.f32 %v1120, 0.6931472
    %v1169 = vsub.f32 %v1121, 0.6931472
    %v1170 = vsub.f32 %v1122, 0.6931472
    %v1171 = vsub.f32 %v1123, 0.6931472
    %v1172 = vsub.f32 %v1124, 0.6931472
    %v1173 = vsub.f32 %v1125, 0.6931472
    %v1174 = vsub.f32 %v1126, 0.6931472
    %v1175 = vsub.f32 %v1127, 0.6931472
    %v1176 = vsub.f32 %v1128, 0.6931472
    %v1177 = vsub.f32 %v1129, 0.6931472
    %v1178 = vsub.f32 %v1130, 0.6931472
    %v1179 = vsub.f32 %v1131, 0.6931472
    %v1180 = vsub.f32 %v1132, 0.6931472
    %v1181 = vsub.f32 %v1133, 0.6931472
    %v1182 = vsub.f32 %v1134, 0.6931472
    %v1183 = vld [vmem:[%s10] sm:$0xff]
    %v1184 = vld [vmem:[%s10 + $0x8] sm:$0xff]
    %v1185 = vld [vmem:[%s10 + $0x10] sm:$0xff]
    %v1186 = vld [vmem:[%s10 + $0x18] sm:$0xff]
    %v1187 = vld [vmem:[%s10 + $0x20] sm:$0xff]
    %v1188 = vld [vmem:[%s10 + $0x28] sm:$0xff]
    %v1189 = vld [vmem:[%s10 + $0x30] sm:$0xff]
    %v1190 = vld [vmem:[%s10 + $0x38] sm:$0xff]
    %v1191 = vld [vmem:[%s10 + $0x40] sm:$0xff]
    %v1192 = vld [vmem:[%s10 + $0x48] sm:$0xff]
    %v1193 = vld [vmem:[%s10 + $0x50] sm:$0xff]
    %v1194 = vld [vmem:[%s10 + $0x58] sm:$0xff]
    %v1195 = vld [vmem:[%s10 + $0x60] sm:$0xff]
    %v1196 = vld [vmem:[%s10 + $0x68] sm:$0xff]
    %v1197 = vld [vmem:[%s10 + $0x70] sm:$0xff]
    %v1198 = vld [vmem:[%s10 + $0x78] sm:$0xff]
    %v1199 = vld [vmem:[%s11] sm:$0x1]
    %v1201 = vperm.slane %v1199, 0
    %1203 = vmatpush.msra.mxu0 %v1198
    %1204 = vmatpush.msra.mxu0 %v1197
    %1205 = vmatpush.msra.mxu0 %v1196
    %1206 = vmatpush.msra.mxu0 %v1195
    %1207 = vmatpush.msra.mxu0 %v1194
    %1208 = vmatpush.msra.mxu0 %v1193
    %1209 = vmatpush.msra.mxu0 %v1192
    %1210 = vmatpush.msra.mxu0 %v1191
    %1211 = vmatpush.msra.mxu0 %v1190
    %1212 = vmatpush.msra.mxu0 %v1189
    %1213 = vmatpush.msra.mxu0 %v1188
    %1214 = vmatpush.msra.mxu0 %v1187
    %1215 = vmatpush.msra.mxu0 %v1186
    %1216 = vmatpush.msra.mxu0 %v1185
    %1217 = vmatpush.msra.mxu0 %v1184
    %1218 = vmatpush.msra.mxu0 %v1183
    %1219 = vmatmul.f32.gmra.mxu0 %v1135
    %v1220 = vpop.f32.mrf.mxu0
    %v1221 = vadd.f32 %v1201, %v1220
    %1222 = vmatmul.f32.gmra.mxu0 %v1136
    %v1223 = vpop.f32.mrf.mxu0
    %v1224 = vadd.f32 %v1201, %v1223
    %1225 = vmatmul.f32.gmra.mxu0 %v1137
    %v1226 = vpop.f32.mrf.mxu0
    %v1227 = vadd.f32 %v1201, %v1226
    %1228 = vmatmul.f32.gmra.mxu0 %v1138
    %v1229 = vpop.f32.mrf.mxu0
    %v1230 = vadd.f32 %v1201, %v1229
    %1231 = vmatmul.f32.gmra.mxu0 %v1139
    %v1232 = vpop.f32.mrf.mxu0
    %v1233 = vadd.f32 %v1201, %v1232
    %1234 = vmatmul.f32.gmra.mxu0 %v1140
    %v1235 = vpop.f32.mrf.mxu0
    %v1236 = vadd.f32 %v1201, %v1235
    %1237 = vmatmul.f32.gmra.mxu0 %v1141
    %v1238 = vpop.f32.mrf.mxu0
    %v1239 = vadd.f32 %v1201, %v1238
    %1240 = vmatmul.f32.gmra.mxu0 %v1142
    %v1241 = vpop.f32.mrf.mxu0
    %v1242 = vadd.f32 %v1201, %v1241
    %1243 = vmatmul.f32.gmra.mxu0 %v1143
    %v1244 = vpop.f32.mrf.mxu0
    %v1245 = vadd.f32 %v1201, %v1244
    %1246 = vmatmul.f32.gmra.mxu0 %v1144
    %v1247 = vpop.f32.mrf.mxu0
    %v1248 = vadd.f32 %v1201, %v1247
    %1249 = vmatmul.f32.gmra.mxu0 %v1145
    %v1250 = vpop.f32.mrf.mxu0
    %v1251 = vadd.f32 %v1201, %v1250
    %1252 = vmatmul.f32.gmra.mxu0 %v1146
    %v1253 = vpop.f32.mrf.mxu0
    %v1254 = vadd.f32 %v1201, %v1253
    %1255 = vmatmul.f32.gmra.mxu0 %v1147
    %v1256 = vpop.f32.mrf.mxu0
    %v1257 = vadd.f32 %v1201, %v1256
    %1258 = vmatmul.f32.gmra.mxu0 %v1148
    %v1259 = vpop.f32.mrf.mxu0
    %v1260 = vadd.f32 %v1201, %v1259
    %1261 = vmatmul.f32.gmra.mxu0 %v1149
    %v1262 = vpop.f32.mrf.mxu0
    %v1263 = vadd.f32 %v1201, %v1262
    %1264 = vmatmul.f32.gmra.mxu0 %v1150
    %v1265 = vpop.f32.mrf.mxu0
    %v1266 = vadd.f32 %v1201, %v1265
    %1267 = vmatmul.f32.gmra.mxu0 %v1151
    %v1268 = vpop.f32.mrf.mxu0
    %v1269 = vadd.f32 %v1201, %v1268
    %1270 = vmatmul.f32.gmra.mxu0 %v1152
    %v1271 = vpop.f32.mrf.mxu0
    %v1272 = vadd.f32 %v1201, %v1271
    %1273 = vmatmul.f32.gmra.mxu0 %v1153
    %v1274 = vpop.f32.mrf.mxu0
    %v1275 = vadd.f32 %v1201, %v1274
    %1276 = vmatmul.f32.gmra.mxu0 %v1154
    %v1277 = vpop.f32.mrf.mxu0
    %v1278 = vadd.f32 %v1201, %v1277
    %1279 = vmatmul.f32.gmra.mxu0 %v1155
    %v1280 = vpop.f32.mrf.mxu0
    %v1281 = vadd.f32 %v1201, %v1280
    %1282 = vmatmul.f32.gmra.mxu0 %v1156
    %v1283 = vpop.f32.mrf.mxu0
    %v1284 = vadd.f32 %v1201, %v1283
    %1285 = vmatmul.f32.gmra.mxu0 %v1157
    %v1286 = vpop.f32.mrf.mxu0
    %v1287 = vadd.f32 %v1201, %v1286
    %1288 = vmatmul.f32.gmra.mxu0 %v1158
    %v1289 = vpop.f32.mrf.mxu0
    %v1290 = vadd.f32 %v1201, %v1289
    %1291 = vmatmul.f32.gmra.mxu0 %v1159
    %v1292 = vpop.f32.mrf.mxu0
    %v1293 = vadd.f32 %v1201, %v1292
    %1294 = vmatmul.f32.gmra.mxu0 %v1160
    %v1295 = vpop.f32.mrf.mxu0
    %v1296 = vadd.f32 %v1201, %v1295
    %1297 = vmatmul.f32.gmra.mxu0 %v1161
    %v1298 = vpop.f32.mrf.mxu0
    %v1299 = vadd.f32 %v1201, %v1298
    %1300 = vmatmul.f32.gmra.mxu0 %v1162
    %v1301 = vpop.f32.mrf.mxu0
    %v1302 = vadd.f32 %v1201, %v1301
    %1303 = vmatmul.f32.gmra.mxu0 %v1163
    %v1304 = vpop.f32.mrf.mxu0
    %v1305 = vadd.f32 %v1201, %v1304
    %1306 = vmatmul.f32.gmra.mxu0 %v1164
    %v1307 = vpop.f32.mrf.mxu0
    %v1308 = vadd.f32 %v1201, %v1307
    %1309 = vmatmul.f32.gmra.mxu0 %v1165
    %v1310 = vpop.f32.mrf.mxu0
    %v1311 = vadd.f32 %v1201, %v1310
    %1312 = vmatmul.f32.gmra.mxu0 %v1166
    %v1313 = vpop.f32.mrf.mxu0
    %v1314 = vadd.f32 %v1201, %v1313
    %1315 = vmatmul.f32.gmra.mxu0 %v1167
    %v1316 = vpop.f32.mrf.mxu0
    %v1317 = vadd.f32 %v1201, %v1316
    %1318 = vmatmul.f32.gmra.mxu0 %v1168
    %v1319 = vpop.f32.mrf.mxu0
    %v1320 = vadd.f32 %v1201, %v1319
    %1321 = vmatmul.f32.gmra.mxu0 %v1169
    %v1322 = vpop.f32.mrf.mxu0
    %v1323 = vadd.f32 %v1201, %v1322
    %1324 = vmatmul.f32.gmra.mxu0 %v1170
    %v1325 = vpop.f32.mrf.mxu0
    %v1326 = vadd.f32 %v1201, %v1325
    %1327 = vmatmul.f32.gmra.mxu0 %v1171
    %v1328 = vpop.f32.mrf.mxu0
    %v1329 = vadd.f32 %v1201, %v1328
    %1330 = vmatmul.f32.gmra.mxu0 %v1172
    %v1331 = vpop.f32.mrf.mxu0
    %v1332 = vadd.f32 %v1201, %v1331
    %1333 = vmatmul.f32.gmra.mxu0 %v1173
    %v1334 = vpop.f32.mrf.mxu0
    %v1335 = vadd.f32 %v1201, %v1334
    %1336 = vmatmul.f32.gmra.mxu0 %v1174
    %v1337 = vpop.f32.mrf.mxu0
    %v1338 = vadd.f32 %v1201, %v1337
    %1339 = vmatmul.f32.gmra.mxu0 %v1175
    %v1340 = vpop.f32.mrf.mxu0
    %v1341 = vadd.f32 %v1201, %v1340
    %1342 = vmatmul.f32.gmra.mxu0 %v1176
    %v1343 = vpop.f32.mrf.mxu0
    %v1344 = vadd.f32 %v1201, %v1343
    %1345 = vmatmul.f32.gmra.mxu0 %v1177
    %v1346 = vpop.f32.mrf.mxu0
    %v1347 = vadd.f32 %v1201, %v1346
    %1348 = vmatmul.f32.gmra.mxu0 %v1178
    %v1349 = vpop.f32.mrf.mxu0
    %v1350 = vadd.f32 %v1201, %v1349
    %1351 = vmatmul.f32.gmra.mxu0 %v1179
    %v1352 = vpop.f32.mrf.mxu0
    %v1353 = vadd.f32 %v1201, %v1352
    %1354 = vmatmul.f32.gmra.mxu0 %v1180
    %v1355 = vpop.f32.mrf.mxu0
    %v1356 = vadd.f32 %v1201, %v1355
    %1357 = vmatmul.f32.gmra.mxu0 %v1181
    %v1358 = vpop.f32.mrf.mxu0
    %v1359 = vadd.f32 %v1201, %v1358
    %1360 = vmatmul.f32.gmra.mxu0 %v1182
    %v1361 = vpop.f32.mrf.mxu0
    %v1362 = vadd.f32 %v1201, %v1361
    %1363 = vdwg.mxu0
    %v1364 = vld [vmem:[%s124] sm:$0xff]
    %v1365 = vld [vmem:[%s124 + $0x8] sm:$0xff]
    %v1366 = vld [vmem:[%s124 + $0x10] sm:$0xff]
    %v1367 = vld [vmem:[%s124 + $0x18] sm:$0xff]
    %v1368 = vld [vmem:[%s124 + $0x20] sm:$0xff]
    %v1369 = vld [vmem:[%s124 + $0x28] sm:$0xff]
    %v1370 = vld [vmem:[%s124 + $0x30] sm:$0xff]
    %v1371 = vld [vmem:[%s124 + $0x38] sm:$0xff]
    %v1372 = vld [vmem:[%s124 + $0x40] sm:$0xff]
    %v1373 = vld [vmem:[%s124 + $0x48] sm:$0xff]
    %v1374 = vld [vmem:[%s124 + $0x50] sm:$0xff]
    %v1375 = vld [vmem:[%s124 + $0x58] sm:$0xff]
    %v1376 = vld [vmem:[%s124 + $0x60] sm:$0xff]
    %v1377 = vld [vmem:[%s124 + $0x68] sm:$0xff]
    %v1378 = vld [vmem:[%s124 + $0x70] sm:$0xff]
    %v1379 = vld [vmem:[%s124 + $0x78] sm:$0xff]
    %v1380 = vld [vmem:[%s124 + $0x80] sm:$0xff]
    %v1381 = vld [vmem:[%s124 + $0x88] sm:$0xff]
    %v1382 = vld [vmem:[%s124 + $0x90] sm:$0xff]
    %v1383 = vld [vmem:[%s124 + $0x98] sm:$0xff]
    %v1384 = vld [vmem:[%s124 + $0xa0] sm:$0xff]
    %v1385 = vld [vmem:[%s124 + $0xa8] sm:$0xff]
    %v1386 = vld [vmem:[%s124 + $0xb0] sm:$0xff]
    %v1387 = vld [vmem:[%s124 + $0xb8] sm:$0xff]
    %v1388 = vld [vmem:[%s124 + $0xc0] sm:$0xff]
    %v1389 = vld [vmem:[%s124 + $0xc8] sm:$0xff]
    %v1390 = vld [vmem:[%s124 + $0xd0] sm:$0xff]
    %v1391 = vld [vmem:[%s124 + $0xd8] sm:$0xff]
    %v1392 = vld [vmem:[%s124 + $0xe0] sm:$0xff]
    %v1393 = vld [vmem:[%s124 + $0xe8] sm:$0xff]
    %v1394 = vld [vmem:[%s124 + $0xf0] sm:$0xff]
    %v1395 = vld [vmem:[%s124 + $0xf8] sm:$0xff]
    %v1396 = vld [vmem:[%s124 + $0x100] sm:$0xff]
    %v1397 = vld [vmem:[%s124 + $0x108] sm:$0xff]
    %v1398 = vld [vmem:[%s124 + $0x110] sm:$0xff]
    %v1399 = vld [vmem:[%s124 + $0x118] sm:$0xff]
    %v1400 = vld [vmem:[%s124 + $0x120] sm:$0xff]
    %v1401 = vld [vmem:[%s124 + $0x128] sm:$0xff]
    %v1402 = vld [vmem:[%s124 + $0x130] sm:$0xff]
    %v1403 = vld [vmem:[%s124 + $0x138] sm:$0xff]
    %v1404 = vld [vmem:[%s124 + $0x140] sm:$0xff]
    %v1405 = vld [vmem:[%s124 + $0x148] sm:$0xff]
    %v1406 = vld [vmem:[%s124 + $0x150] sm:$0xff]
    %v1407 = vld [vmem:[%s124 + $0x158] sm:$0xff]
    %v1408 = vld [vmem:[%s124 + $0x160] sm:$0xff]
    %v1409 = vld [vmem:[%s124 + $0x168] sm:$0xff]
    %v1410 = vld [vmem:[%s124 + $0x170] sm:$0xff]
    %v1411 = vld [vmem:[%s124 + $0x178] sm:$0xff]
    %1413 = vset.pattern.permute.xlu0 0
    %1414 = vperm.xlu0 %1413, %v1364
    %v1415 = vpop.permute.xlu0 %1414
    %1418 = vset.pattern.permute.xlu0 0
    %1419 = vperm.xlu0 %1418, %v1365
    %v1420 = vpop.permute.xlu0 %1419
    %1423 = vset.pattern.permute.xlu0 0
    %1424 = vperm.xlu0 %1423, %v1366
    %v1425 = vpop.permute.xlu0 %1424
    %1428 = vset.pattern.permute.xlu0 0
    %1429 = vperm.xlu0 %1428, %v1367
    %v1430 = vpop.permute.xlu0 %1429
    %1433 = vset.pattern.permute.xlu0 0
    %1434 = vperm.xlu0 %1433, %v1368
    %v1435 = vpop.permute.xlu0 %1434
    %1438 = vset.pattern.permute.xlu0 0
    %1439 = vperm.xlu0 %1438, %v1369
    %v1440 = vpop.permute.xlu0 %1439
    %1443 = vset.pattern.permute.xlu0 0
    %1444 = vperm.xlu0 %1443, %v1370
    %v1445 = vpop.permute.xlu0 %1444
    %1448 = vset.pattern.permute.xlu0 0
    %1449 = vperm.xlu0 %1448, %v1371
    %v1450 = vpop.permute.xlu0 %1449
    %1453 = vset.pattern.permute.xlu0 0
    %1454 = vperm.xlu0 %1453, %v1372
    %v1455 = vpop.permute.xlu0 %1454
    %1458 = vset.pattern.permute.xlu0 0
    %1459 = vperm.xlu0 %1458, %v1373
    %v1460 = vpop.permute.xlu0 %1459
    %1463 = vset.pattern.permute.xlu0 0
    %1464 = vperm.xlu0 %1463, %v1374
    %v1465 = vpop.permute.xlu0 %1464
    %1468 = vset.pattern.permute.xlu0 0
    %1469 = vperm.xlu0 %1468, %v1375
    %v1470 = vpop.permute.xlu0 %1469
    %1473 = vset.pattern.permute.xlu0 0
    %1474 = vperm.xlu0 %1473, %v1376
    %v1475 = vpop.permute.xlu0 %1474
    %1478 = vset.pattern.permute.xlu0 0
    %1479 = vperm.xlu0 %1478, %v1377
    %v1480 = vpop.permute.xlu0 %1479
    %1483 = vset.pattern.permute.xlu0 0
    %1484 = vperm.xlu0 %1483, %v1378
    %v1485 = vpop.permute.xlu0 %1484
    %1488 = vset.pattern.permute.xlu0 0
    %1489 = vperm.xlu0 %1488, %v1379
    %v1490 = vpop.permute.xlu0 %1489
    %1493 = vset.pattern.permute.xlu0 0
    %1494 = vperm.xlu0 %1493, %v1380
    %v1495 = vpop.permute.xlu0 %1494
    %1498 = vset.pattern.permute.xlu0 0
    %1499 = vperm.xlu0 %1498, %v1381
    %v1500 = vpop.permute.xlu0 %1499
    %1503 = vset.pattern.permute.xlu0 0
    %1504 = vperm.xlu0 %1503, %v1382
    %v1505 = vpop.permute.xlu0 %1504
    %1508 = vset.pattern.permute.xlu0 0
    %1509 = vperm.xlu0 %1508, %v1383
    %v1510 = vpop.permute.xlu0 %1509
    %1513 = vset.pattern.permute.xlu0 0
    %1514 = vperm.xlu0 %1513, %v1384
    %v1515 = vpop.permute.xlu0 %1514
    %1518 = vset.pattern.permute.xlu0 0
    %1519 = vperm.xlu0 %1518, %v1385
    %v1520 = vpop.permute.xlu0 %1519
    %1523 = vset.pattern.permute.xlu0 0
    %1524 = vperm.xlu0 %1523, %v1386
    %v1525 = vpop.permute.xlu0 %1524
    %1528 = vset.pattern.permute.xlu0 0
    %1529 = vperm.xlu0 %1528, %v1387
    %v1530 = vpop.permute.xlu0 %1529
    %1533 = vset.pattern.permute.xlu0 0
    %1534 = vperm.xlu0 %1533, %v1388
    %v1535 = vpop.permute.xlu0 %1534
    %1538 = vset.pattern.permute.xlu0 0
    %1539 = vperm.xlu0 %1538, %v1389
    %v1540 = vpop.permute.xlu0 %1539
    %1543 = vset.pattern.permute.xlu0 0
    %1544 = vperm.xlu0 %1543, %v1390
    %v1545 = vpop.permute.xlu0 %1544
    %1548 = vset.pattern.permute.xlu0 0
    %1549 = vperm.xlu0 %1548, %v1391
    %v1550 = vpop.permute.xlu0 %1549
    %1553 = vset.pattern.permute.xlu0 0
    %1554 = vperm.xlu0 %1553, %v1392
    %v1555 = vpop.permute.xlu0 %1554
    %1558 = vset.pattern.permute.xlu0 0
    %1559 = vperm.xlu0 %1558, %v1393
    %v1560 = vpop.permute.xlu0 %1559
    %1563 = vset.pattern.permute.xlu0 0
    %1564 = vperm.xlu0 %1563, %v1394
    %v1565 = vpop.permute.xlu0 %1564
    %1568 = vset.pattern.permute.xlu0 0
    %1569 = vperm.xlu0 %1568, %v1395
    %v1570 = vpop.permute.xlu0 %1569
    %1573 = vset.pattern.permute.xlu0 0
    %1574 = vperm.xlu0 %1573, %v1396
    %v1575 = vpop.permute.xlu0 %1574
    %1578 = vset.pattern.permute.xlu0 0
    %1579 = vperm.xlu0 %1578, %v1397
    %v1580 = vpop.permute.xlu0 %1579
    %1583 = vset.pattern.permute.xlu0 0
    %1584 = vperm.xlu0 %1583, %v1398
    %v1585 = vpop.permute.xlu0 %1584
    %1588 = vset.pattern.permute.xlu0 0
    %1589 = vperm.xlu0 %1588, %v1399
    %v1590 = vpop.permute.xlu0 %1589
    %1593 = vset.pattern.permute.xlu0 0
    %1594 = vperm.xlu0 %1593, %v1400
    %v1595 = vpop.permute.xlu0 %1594
    %1598 = vset.pattern.permute.xlu0 0
    %1599 = vperm.xlu0 %1598, %v1401
    %v1600 = vpop.permute.xlu0 %1599
    %1603 = vset.pattern.permute.xlu0 0
    %1604 = vperm.xlu0 %1603, %v1402
    %v1605 = vpop.permute.xlu0 %1604
    %1608 = vset.pattern.permute.xlu0 0
    %1609 = vperm.xlu0 %1608, %v1403
    %v1610 = vpop.permute.xlu0 %1609
    %1613 = vset.pattern.permute.xlu0 0
    %1614 = vperm.xlu0 %1613, %v1404
    %v1615 = vpop.permute.xlu0 %1614
    %1618 = vset.pattern.permute.xlu0 0
    %1619 = vperm.xlu0 %1618, %v1405
    %v1620 = vpop.permute.xlu0 %1619
    %1623 = vset.pattern.permute.xlu0 0
    %1624 = vperm.xlu0 %1623, %v1406
    %v1625 = vpop.permute.xlu0 %1624
    %1628 = vset.pattern.permute.xlu0 0
    %1629 = vperm.xlu0 %1628, %v1407
    %v1630 = vpop.permute.xlu0 %1629
    %1633 = vset.pattern.permute.xlu0 0
    %1634 = vperm.xlu0 %1633, %v1408
    %v1635 = vpop.permute.xlu0 %1634
    %1638 = vset.pattern.permute.xlu0 0
    %1639 = vperm.xlu0 %1638, %v1409
    %v1640 = vpop.permute.xlu0 %1639
    %1643 = vset.pattern.permute.xlu0 0
    %1644 = vperm.xlu0 %1643, %v1410
    %v1645 = vpop.permute.xlu0 %1644
    %1648 = vset.pattern.permute.xlu0 0
    %1649 = vperm.xlu0 %1648, %v1411
    %v1650 = vpop.permute.xlu0 %1649
    %v1652 = vmul.f32 %v1221, %v1415
    %v1653 = vmul.f32 %v1224, %v1420
    %v1654 = vmul.f32 %v1227, %v1425
    %v1655 = vmul.f32 %v1230, %v1430
    %v1656 = vmul.f32 %v1233, %v1435
    %v1657 = vmul.f32 %v1236, %v1440
    %v1658 = vmul.f32 %v1239, %v1445
    %v1659 = vmul.f32 %v1242, %v1450
    %v1660 = vmul.f32 %v1245, %v1455
    %v1661 = vmul.f32 %v1248, %v1460
    %v1662 = vmul.f32 %v1251, %v1465
    %v1663 = vmul.f32 %v1254, %v1470
    %v1664 = vmul.f32 %v1257, %v1475
    %v1665 = vmul.f32 %v1260, %v1480
    %v1666 = vmul.f32 %v1263, %v1485
    %v1667 = vmul.f32 %v1266, %v1490
    %v1668 = vmul.f32 %v1269, %v1495
    %v1669 = vmul.f32 %v1272, %v1500
    %v1670 = vmul.f32 %v1275, %v1505
    %v1671 = vmul.f32 %v1278, %v1510
    %v1672 = vmul.f32 %v1281, %v1515
    %v1673 = vmul.f32 %v1284, %v1520
    %v1674 = vmul.f32 %v1287, %v1525
    %v1675 = vmul.f32 %v1290, %v1530
    %v1676 = vmul.f32 %v1293, %v1535
    %v1677 = vmul.f32 %v1296, %v1540
    %v1678 = vmul.f32 %v1299, %v1545
    %v1679 = vmul.f32 %v1302, %v1550
    %v1680 = vmul.f32 %v1305, %v1555
    %v1681 = vmul.f32 %v1308, %v1560
    %v1682 = vmul.f32 %v1311, %v1565
    %v1683 = vmul.f32 %v1314, %v1570
    %v1684 = vmul.f32 %v1317, %v1575
    %v1685 = vmul.f32 %v1320, %v1580
    %v1686 = vmul.f32 %v1323, %v1585
    %v1687 = vmul.f32 %v1326, %v1590
    %v1688 = vmul.f32 %v1329, %v1595
    %v1689 = vmul.f32 %v1332, %v1600
    %v1690 = vmul.f32 %v1335, %v1605
    %v1691 = vmul.f32 %v1338, %v1610
    %v1692 = vmul.f32 %v1341, %v1615
    %v1693 = vmul.f32 %v1344, %v1620
    %v1694 = vmul.f32 %v1347, %v1625
    %v1695 = vmul.f32 %v1350, %v1630
    %v1696 = vmul.f32 %v1353, %v1635
    %v1697 = vmul.f32 %v1356, %v1640
    %v1698 = vmul.f32 %v1359, %v1645
    %v1699 = vmul.f32 %v1362, %v1650
    %v1700 = vld [vmem:[%s5] sm:$0x1]
    %v1701 = vld [vmem:[%s109] sm:$0xff]
    %v1702 = vld [vmem:[%s109 + $0x8] sm:$0xff]
    %v1703 = vld [vmem:[%s109 + $0x10] sm:$0xff]
    %v1704 = vld [vmem:[%s109 + $0x18] sm:$0xff]
    %v1705 = vld [vmem:[%s109 + $0x20] sm:$0xff]
    %v1706 = vld [vmem:[%s109 + $0x28] sm:$0xff]
    %v1707 = vld [vmem:[%s109 + $0x30] sm:$0xff]
    %v1708 = vld [vmem:[%s109 + $0x38] sm:$0xff]
    %v1709 = vld [vmem:[%s109 + $0x40] sm:$0xff]
    %v1710 = vld [vmem:[%s109 + $0x48] sm:$0xff]
    %v1711 = vld [vmem:[%s109 + $0x50] sm:$0xff]
    %v1712 = vld [vmem:[%s109 + $0x58] sm:$0xff]
    %v1713 = vld [vmem:[%s109 + $0x60] sm:$0xff]
    %v1714 = vld [vmem:[%s109 + $0x68] sm:$0xff]
    %v1715 = vld [vmem:[%s109 + $0x70] sm:$0xff]
    %v1716 = vld [vmem:[%s109 + $0x78] sm:$0xff]
    %v1717 = vld [vmem:[%s109 + $0x80] sm:$0xff]
    %v1718 = vld [vmem:[%s109 + $0x88] sm:$0xff]
    %v1719 = vld [vmem:[%s109 + $0x90] sm:$0xff]
    %v1720 = vld [vmem:[%s109 + $0x98] sm:$0xff]
    %v1721 = vld [vmem:[%s109 + $0xa0] sm:$0xff]
    %v1722 = vld [vmem:[%s109 + $0xa8] sm:$0xff]
    %v1723 = vld [vmem:[%s109 + $0xb0] sm:$0xff]
    %v1724 = vld [vmem:[%s109 + $0xb8] sm:$0xff]
    %v1725 = vld [vmem:[%s109 + $0xc0] sm:$0xff]
    %v1726 = vld [vmem:[%s109 + $0xc8] sm:$0xff]
    %v1727 = vld [vmem:[%s109 + $0xd0] sm:$0xff]
    %v1728 = vld [vmem:[%s109 + $0xd8] sm:$0xff]
    %v1729 = vld [vmem:[%s109 + $0xe0] sm:$0xff]
    %v1730 = vld [vmem:[%s109 + $0xe8] sm:$0xff]
    %v1731 = vld [vmem:[%s109 + $0xf0] sm:$0xff]
    %v1732 = vld [vmem:[%s109 + $0xf8] sm:$0xff]
    %v1733 = vld [vmem:[%s109 + $0x100] sm:$0xff]
    %v1734 = vld [vmem:[%s109 + $0x108] sm:$0xff]
    %v1735 = vld [vmem:[%s109 + $0x110] sm:$0xff]
    %v1736 = vld [vmem:[%s109 + $0x118] sm:$0xff]
    %v1737 = vld [vmem:[%s109 + $0x120] sm:$0xff]
    %v1738 = vld [vmem:[%s109 + $0x128] sm:$0xff]
    %v1739 = vld [vmem:[%s109 + $0x130] sm:$0xff]
    %v1740 = vld [vmem:[%s109 + $0x138] sm:$0xff]
    %v1741 = vld [vmem:[%s109 + $0x140] sm:$0xff]
    %v1742 = vld [vmem:[%s109 + $0x148] sm:$0xff]
    %v1743 = vld [vmem:[%s109 + $0x150] sm:$0xff]
    %v1744 = vld [vmem:[%s109 + $0x158] sm:$0xff]
    %v1745 = vld [vmem:[%s109 + $0x160] sm:$0xff]
    %v1746 = vld [vmem:[%s109 + $0x168] sm:$0xff]
    %v1747 = vld [vmem:[%s109 + $0x170] sm:$0xff]
    %v1748 = vld [vmem:[%s109 + $0x178] sm:$0xff]
    %v1749 = vperm.slane %v1700, 0
    %1750 = vset.pattern.permute.xlu0 0
    %1751 = vperm.xlu0 %1750, %v1701
    %v1752 = vpop.permute.xlu0 %1751
    %1753 = vset.pattern.permute.xlu0 0
    %1754 = vperm.xlu0 %1753, %v1702
    %v1755 = vpop.permute.xlu0 %1754
    %1756 = vset.pattern.permute.xlu0 0
    %1757 = vperm.xlu0 %1756, %v1703
    %v1758 = vpop.permute.xlu0 %1757
    %1759 = vset.pattern.permute.xlu0 0
    %1760 = vperm.xlu0 %1759, %v1704
    %v1761 = vpop.permute.xlu0 %1760
    %1762 = vset.pattern.permute.xlu0 0
    %1763 = vperm.xlu0 %1762, %v1705
    %v1764 = vpop.permute.xlu0 %1763
    %1765 = vset.pattern.permute.xlu0 0
    %1766 = vperm.xlu0 %1765, %v1706
    %v1767 = vpop.permute.xlu0 %1766
    %1768 = vset.pattern.permute.xlu0 0
    %1769 = vperm.xlu0 %1768, %v1707
    %v1770 = vpop.permute.xlu0 %1769
    %1771 = vset.pattern.permute.xlu0 0
    %1772 = vperm.xlu0 %1771, %v1708
    %v1773 = vpop.permute.xlu0 %1772
    %1774 = vset.pattern.permute.xlu0 0
    %1775 = vperm.xlu0 %1774, %v1709
    %v1776 = vpop.permute.xlu0 %1775
    %1777 = vset.pattern.permute.xlu0 0
    %1778 = vperm.xlu0 %1777, %v1710
    %v1779 = vpop.permute.xlu0 %1778
    %1780 = vset.pattern.permute.xlu0 0
    %1781 = vperm.xlu0 %1780, %v1711
    %v1782 = vpop.permute.xlu0 %1781
    %1783 = vset.pattern.permute.xlu0 0
    %1784 = vperm.xlu0 %1783, %v1712
    %v1785 = vpop.permute.xlu0 %1784
    %1786 = vset.pattern.permute.xlu0 0
    %1787 = vperm.xlu0 %1786, %v1713
    %v1788 = vpop.permute.xlu0 %1787
    %1789 = vset.pattern.permute.xlu0 0
    %1790 = vperm.xlu0 %1789, %v1714
    %v1791 = vpop.permute.xlu0 %1790
    %1792 = vset.pattern.permute.xlu0 0
    %1793 = vperm.xlu0 %1792, %v1715
    %v1794 = vpop.permute.xlu0 %1793
    %1795 = vset.pattern.permute.xlu0 0
    %1796 = vperm.xlu0 %1795, %v1716
    %v1797 = vpop.permute.xlu0 %1796
    %1798 = vset.pattern.permute.xlu0 0
    %1799 = vperm.xlu0 %1798, %v1717
    %v1800 = vpop.permute.xlu0 %1799
    %1801 = vset.pattern.permute.xlu0 0
    %1802 = vperm.xlu0 %1801, %v1718
    %v1803 = vpop.permute.xlu0 %1802
    %1804 = vset.pattern.permute.xlu0 0
    %1805 = vperm.xlu0 %1804, %v1719
    %v1806 = vpop.permute.xlu0 %1805
    %1807 = vset.pattern.permute.xlu0 0
    %1808 = vperm.xlu0 %1807, %v1720
    %v1809 = vpop.permute.xlu0 %1808
    %1810 = vset.pattern.permute.xlu0 0
    %1811 = vperm.xlu0 %1810, %v1721
    %v1812 = vpop.permute.xlu0 %1811
    %1813 = vset.pattern.permute.xlu0 0
    %1814 = vperm.xlu0 %1813, %v1722
    %v1815 = vpop.permute.xlu0 %1814
    %1816 = vset.pattern.permute.xlu0 0
    %1817 = vperm.xlu0 %1816, %v1723
    %v1818 = vpop.permute.xlu0 %1817
    %1819 = vset.pattern.permute.xlu0 0
    %1820 = vperm.xlu0 %1819, %v1724
    %v1821 = vpop.permute.xlu0 %1820
    %1822 = vset.pattern.permute.xlu0 0
    %1823 = vperm.xlu0 %1822, %v1725
    %v1824 = vpop.permute.xlu0 %1823
    %1825 = vset.pattern.permute.xlu0 0
    %1826 = vperm.xlu0 %1825, %v1726
    %v1827 = vpop.permute.xlu0 %1826
    %1828 = vset.pattern.permute.xlu0 0
    %1829 = vperm.xlu0 %1828, %v1727
    %v1830 = vpop.permute.xlu0 %1829
    %1831 = vset.pattern.permute.xlu0 0
    %1832 = vperm.xlu0 %1831, %v1728
    %v1833 = vpop.permute.xlu0 %1832
    %1834 = vset.pattern.permute.xlu0 0
    %1835 = vperm.xlu0 %1834, %v1729
    %v1836 = vpop.permute.xlu0 %1835
    %1837 = vset.pattern.permute.xlu0 0
    %1838 = vperm.xlu0 %1837, %v1730
    %v1839 = vpop.permute.xlu0 %1838
    %1840 = vset.pattern.permute.xlu0 0
    %1841 = vperm.xlu0 %1840, %v1731
    %v1842 = vpop.permute.xlu0 %1841
    %1843 = vset.pattern.permute.xlu0 0
    %1844 = vperm.xlu0 %1843, %v1732
    %v1845 = vpop.permute.xlu0 %1844
    %1846 = vset.pattern.permute.xlu0 0
    %1847 = vperm.xlu0 %1846, %v1733
    %v1848 = vpop.permute.xlu0 %1847
    %1849 = vset.pattern.permute.xlu0 0
    %1850 = vperm.xlu0 %1849, %v1734
    %v1851 = vpop.permute.xlu0 %1850
    %1852 = vset.pattern.permute.xlu0 0
    %1853 = vperm.xlu0 %1852, %v1735
    %v1854 = vpop.permute.xlu0 %1853
    %1855 = vset.pattern.permute.xlu0 0
    %1856 = vperm.xlu0 %1855, %v1736
    %v1857 = vpop.permute.xlu0 %1856
    %1858 = vset.pattern.permute.xlu0 0
    %1859 = vperm.xlu0 %1858, %v1737
    %v1860 = vpop.permute.xlu0 %1859
    %1861 = vset.pattern.permute.xlu0 0
    %1862 = vperm.xlu0 %1861, %v1738
    %v1863 = vpop.permute.xlu0 %1862
    %1864 = vset.pattern.permute.xlu0 0
    %1865 = vperm.xlu0 %1864, %v1739
    %v1866 = vpop.permute.xlu0 %1865
    %1867 = vset.pattern.permute.xlu0 0
    %1868 = vperm.xlu0 %1867, %v1740
    %v1869 = vpop.permute.xlu0 %1868
    %1870 = vset.pattern.permute.xlu0 0
    %1871 = vperm.xlu0 %1870, %v1741
    %v1872 = vpop.permute.xlu0 %1871
    %1873 = vset.pattern.permute.xlu0 0
    %1874 = vperm.xlu0 %1873, %v1742
    %v1875 = vpop.permute.xlu0 %1874
    %1876 = vset.pattern.permute.xlu0 0
    %1877 = vperm.xlu0 %1876, %v1743
    %v1878 = vpop.permute.xlu0 %1877
    %1879 = vset.pattern.permute.xlu0 0
    %1880 = vperm.xlu0 %1879, %v1744
    %v1881 = vpop.permute.xlu0 %1880
    %1882 = vset.pattern.permute.xlu0 0
    %1883 = vperm.xlu0 %1882, %v1745
    %v1884 = vpop.permute.xlu0 %1883
    %1885 = vset.pattern.permute.xlu0 0
    %1886 = vperm.xlu0 %1885, %v1746
    %v1887 = vpop.permute.xlu0 %1886
    %1888 = vset.pattern.permute.xlu0 0
    %1889 = vperm.xlu0 %1888, %v1747
    %v1890 = vpop.permute.xlu0 %1889
    %1891 = vset.pattern.permute.xlu0 0
    %1892 = vperm.xlu0 %1891, %v1748
    %v1893 = vpop.permute.xlu0 %1892
    %vm1894 = vcmp.eq.s32.totalorder %v1749, %v1752
    %vm1895 = vcmp.eq.s32.totalorder %v1749, %v1755
    %vm1896 = vcmp.eq.s32.totalorder %v1749, %v1758
    %vm1897 = vcmp.eq.s32.totalorder %v1749, %v1761
    %vm1898 = vcmp.eq.s32.totalorder %v1749, %v1764
    %vm1899 = vcmp.eq.s32.totalorder %v1749, %v1767
    %vm1900 = vcmp.eq.s32.totalorder %v1749, %v1770
    %vm1901 = vcmp.eq.s32.totalorder %v1749, %v1773
    %vm1902 = vcmp.eq.s32.totalorder %v1749, %v1776
    %vm1903 = vcmp.eq.s32.totalorder %v1749, %v1779
    %vm1904 = vcmp.eq.s32.totalorder %v1749, %v1782
    %vm1905 = vcmp.eq.s32.totalorder %v1749, %v1785
    %vm1906 = vcmp.eq.s32.totalorder %v1749, %v1788
    %vm1907 = vcmp.eq.s32.totalorder %v1749, %v1791
    %vm1908 = vcmp.eq.s32.totalorder %v1749, %v1794
    %vm1909 = vcmp.eq.s32.totalorder %v1749, %v1797
    %vm1910 = vcmp.eq.s32.totalorder %v1749, %v1800
    %vm1911 = vcmp.eq.s32.totalorder %v1749, %v1803
    %vm1912 = vcmp.eq.s32.totalorder %v1749, %v1806
    %vm1913 = vcmp.eq.s32.totalorder %v1749, %v1809
    %vm1914 = vcmp.eq.s32.totalorder %v1749, %v1812
    %vm1915 = vcmp.eq.s32.totalorder %v1749, %v1815
    %vm1916 = vcmp.eq.s32.totalorder %v1749, %v1818
    %vm1917 = vcmp.eq.s32.totalorder %v1749, %v1821
    %vm1918 = vcmp.eq.s32.totalorder %v1749, %v1824
    %vm1919 = vcmp.eq.s32.totalorder %v1749, %v1827
    %vm1920 = vcmp.eq.s32.totalorder %v1749, %v1830
    %vm1921 = vcmp.eq.s32.totalorder %v1749, %v1833
    %vm1922 = vcmp.eq.s32.totalorder %v1749, %v1836
    %vm1923 = vcmp.eq.s32.totalorder %v1749, %v1839
    %vm1924 = vcmp.eq.s32.totalorder %v1749, %v1842
    %vm1925 = vcmp.eq.s32.totalorder %v1749, %v1845
    %vm1926 = vcmp.eq.s32.totalorder %v1749, %v1848
    %vm1927 = vcmp.eq.s32.totalorder %v1749, %v1851
    %vm1928 = vcmp.eq.s32.totalorder %v1749, %v1854
    %vm1929 = vcmp.eq.s32.totalorder %v1749, %v1857
    %vm1930 = vcmp.eq.s32.totalorder %v1749, %v1860
    %vm1931 = vcmp.eq.s32.totalorder %v1749, %v1863
    %vm1932 = vcmp.eq.s32.totalorder %v1749, %v1866
    %vm1933 = vcmp.eq.s32.totalorder %v1749, %v1869
    %vm1934 = vcmp.eq.s32.totalorder %v1749, %v1872
    %vm1935 = vcmp.eq.s32.totalorder %v1749, %v1875
    %vm1936 = vcmp.eq.s32.totalorder %v1749, %v1878
    %vm1937 = vcmp.eq.s32.totalorder %v1749, %v1881
    %vm1938 = vcmp.eq.s32.totalorder %v1749, %v1884
    %vm1939 = vcmp.eq.s32.totalorder %v1749, %v1887
    %vm1940 = vcmp.eq.s32.totalorder %v1749, %v1890
    %vm1941 = vcmp.eq.s32.totalorder %v1749, %v1893
    %v1942 = vsel %vm1894, 1, 0
    %v1943 = vsel %vm1895, 1, 0
    %v1944 = vsel %vm1896, 1, 0
    %v1945 = vsel %vm1897, 1, 0
    %v1946 = vsel %vm1898, 1, 0
    %v1947 = vsel %vm1899, 1, 0
    %v1948 = vsel %vm1900, 1, 0
    %v1949 = vsel %vm1901, 1, 0
    %v1950 = vsel %vm1902, 1, 0
    %v1951 = vsel %vm1903, 1, 0
    %v1952 = vsel %vm1904, 1, 0
    %v1953 = vsel %vm1905, 1, 0
    %v1954 = vsel %vm1906, 1, 0
    %v1955 = vsel %vm1907, 1, 0
    %v1956 = vsel %vm1908, 1, 0
    %v1957 = vsel %vm1909, 1, 0
    %v1958 = vsel %vm1910, 1, 0
    %v1959 = vsel %vm1911, 1, 0
    %v1960 = vsel %vm1912, 1, 0
    %v1961 = vsel %vm1913, 1, 0
    %v1962 = vsel %vm1914, 1, 0
    %v1963 = vsel %vm1915, 1, 0
    %v1964 = vsel %vm1916, 1, 0
    %v1965 = vsel %vm1917, 1, 0
    %v1966 = vsel %vm1918, 1, 0
    %v1967 = vsel %vm1919, 1, 0
    %v1968 = vsel %vm1920, 1, 0
    %v1969 = vsel %vm1921, 1, 0
    %v1970 = vsel %vm1922, 1, 0
    %v1971 = vsel %vm1923, 1, 0
    %v1972 = vsel %vm1924, 1, 0
    %v1973 = vsel %vm1925, 1, 0
    %v1974 = vsel %vm1926, 1, 0
    %v1975 = vsel %vm1927, 1, 0
    %v1976 = vsel %vm1928, 1, 0
    %v1977 = vsel %vm1929, 1, 0
    %v1978 = vsel %vm1930, 1, 0
    %v1979 = vsel %vm1931, 1, 0
    %v1980 = vsel %vm1932, 1, 0
    %v1981 = vsel %vm1933, 1, 0
    %v1982 = vsel %vm1934, 1, 0
    %v1983 = vsel %vm1935, 1, 0
    %v1984 = vsel %vm1936, 1, 0
    %v1985 = vsel %vm1937, 1, 0
    %v1986 = vsel %vm1938, 1, 0
    %v1987 = vsel %vm1939, 1, 0
    %v1988 = vsel %vm1940, 1, 0
    %v1989 = vsel %vm1941, 1, 0
    %v1990 = vcvt.s32.f32 %v1942
    %v1991 = vcvt.s32.f32 %v1943
    %v1992 = vcvt.s32.f32 %v1944
    %v1993 = vcvt.s32.f32 %v1945
    %v1994 = vcvt.s32.f32 %v1946
    %v1995 = vcvt.s32.f32 %v1947
    %v1996 = vcvt.s32.f32 %v1948
    %v1997 = vcvt.s32.f32 %v1949
    %v1998 = vcvt.s32.f32 %v1950
    %v1999 = vcvt.s32.f32 %v1951
    %v2000 = vcvt.s32.f32 %v1952
    %v2001 = vcvt.s32.f32 %v1953
    %v2002 = vcvt.s32.f32 %v1954
    %v2003 = vcvt.s32.f32 %v1955
    %v2004 = vcvt.s32.f32 %v1956
    %v2005 = vcvt.s32.f32 %v1957
    %v2006 = vcvt.s32.f32 %v1958
    %v2007 = vcvt.s32.f32 %v1959
    %v2008 = vcvt.s32.f32 %v1960
    %v2009 = vcvt.s32.f32 %v1961
    %v2010 = vcvt.s32.f32 %v1962
    %v2011 = vcvt.s32.f32 %v1963
    %v2012 = vcvt.s32.f32 %v1964
    %v2013 = vcvt.s32.f32 %v1965
    %v2014 = vcvt.s32.f32 %v1966
    %v2015 = vcvt.s32.f32 %v1967
    %v2016 = vcvt.s32.f32 %v1968
    %v2017 = vcvt.s32.f32 %v1969
    %v2018 = vcvt.s32.f32 %v1970
    %v2019 = vcvt.s32.f32 %v1971
    %v2020 = vcvt.s32.f32 %v1972
    %v2021 = vcvt.s32.f32 %v1973
    %v2022 = vcvt.s32.f32 %v1974
    %v2023 = vcvt.s32.f32 %v1975
    %v2024 = vcvt.s32.f32 %v1976
    %v2025 = vcvt.s32.f32 %v1977
    %v2026 = vcvt.s32.f32 %v1978
    %v2027 = vcvt.s32.f32 %v1979
    %v2028 = vcvt.s32.f32 %v1980
    %v2029 = vcvt.s32.f32 %v1981
    %v2030 = vcvt.s32.f32 %v1982
    %v2031 = vcvt.s32.f32 %v1983
    %v2032 = vcvt.s32.f32 %v1984
    %v2033 = vcvt.s32.f32 %v1985
    %v2034 = vcvt.s32.f32 %v1986
    %v2035 = vcvt.s32.f32 %v1987
    %v2036 = vcvt.s32.f32 %v1988
    %v2037 = vcvt.s32.f32 %v1989
    %v2038 = vpack.c.bf16 %v1991, %v1990
    %v2039 = vpack.c.bf16 %v1993, %v1992
    %v2040 = vpack.c.bf16 %v1995, %v1994
    %v2041 = vpack.c.bf16 %v1997, %v1996
    %v2042 = vpack.c.bf16 %v1999, %v1998
    %v2043 = vpack.c.bf16 %v2001, %v2000
    %v2044 = vpack.c.bf16 %v2003, %v2002
    %v2045 = vpack.c.bf16 %v2005, %v2004
    %v2046 = vpack.c.bf16 %v2007, %v2006
    %v2047 = vpack.c.bf16 %v2009, %v2008
    %v2048 = vpack.c.bf16 %v2011, %v2010
    %v2049 = vpack.c.bf16 %v2013, %v2012
    %v2050 = vpack.c.bf16 %v2015, %v2014
    %v2051 = vpack.c.bf16 %v2017, %v2016
    %v2052 = vpack.c.bf16 %v2019, %v2018
    %v2053 = vpack.c.bf16 %v2021, %v2020
    %v2054 = vpack.c.bf16 %v2023, %v2022
    %v2055 = vpack.c.bf16 %v2025, %v2024
    %v2056 = vpack.c.bf16 %v2027, %v2026
    %v2057 = vpack.c.bf16 %v2029, %v2028
    %v2058 = vpack.c.bf16 %v2031, %v2030
    %v2059 = vpack.c.bf16 %v2033, %v2032
    %v2060 = vpack.c.bf16 %v2035, %v2034
    %v2061 = vpack.c.bf16 %v2037, %v2036
    %v2062 = vld [vmem:[#allocation2] sm:$0xf]
    %v2063 = vld [vmem:[#allocation2 + $0x4] sm:$0xf]
    %v2064 = vld [vmem:[#allocation2 + $0x8] sm:$0xf]
    %v2068 = vunpack.c.l.b16 %v2062
    %v2069 = vunpack.c.l.b16 %v2063
    %v2070 = vunpack.c.l.b16 %v2064
    %v2071 = vpack.c.b16 %v2069, %v2068
    %v2072 = vpack.c.b16 %v2070, %v2070
    %vm2074 = vcmask 195584
    %v2076 = vsel %vm2074, %v2038, 0
    %v2079 = vsel %vm2074, %v2039, 0
    %v2082 = vsel %vm2074, %v2040, 0
    %v2085 = vsel %vm2074, %v2041, 0
    %v2088 = vsel %vm2074, %v2042, 0
    %v2091 = vsel %vm2074, %v2043, 0
    %v2094 = vsel %vm2074, %v2044, 0
    %v2097 = vsel %vm2074, %v2045, 0
    %v2100 = vsel %vm2074, %v2046, 0
    %v2103 = vsel %vm2074, %v2047, 0
    %v2106 = vsel %vm2074, %v2048, 0
    %v2109 = vsel %vm2074, %v2049, 0
    %v2112 = vsel %vm2074, %v2050, 0
    %v2115 = vsel %vm2074, %v2051, 0
    %v2118 = vsel %vm2074, %v2052, 0
    %v2121 = vsel %vm2074, %v2053, 0
    %v2124 = vsel %vm2074, %v2054, 0
    %v2127 = vsel %vm2074, %v2055, 0
    %v2130 = vsel %vm2074, %v2056, 0
    %v2133 = vsel %vm2074, %v2057, 0
    %v2136 = vsel %vm2074, %v2058, 0
    %v2139 = vsel %vm2074, %v2059, 0
    %v2142 = vsel %vm2074, %v2060, 0
    %v2145 = vsel %vm2074, %v2061, 0
    %vm2147 = vcmask 1043456
    %v2149 = vsel %vm2147, %v2072, 0
    %2151 = vmatpush.bf16.msra.mxu0 0
    %2152 = vmatpush.bf16.msra.mxu0 0
    %2153 = vmatpush.bf16.msra.mxu0 0
    %2154 = vmatpush.bf16.msra.mxu0 0
    %2155 = vmatpush.bf16.msra.mxu0 0
    %2156 = vmatpush.bf16.msra.mxu0 0
    %2157 = vmatpush.bf16.msra.mxu0 %v2149
    %2158 = vmatpush.bf16.msra.mxu0 %v2071
    %2159 = vmatmul.bf16.gmra.mxu0 %v2076
    %v2160 = vpop.f32.mrf.mxu0
    %v2161 = vadd.f32 0.0, %v2160
    %v2162 = vpop.f32.mrf.mxu0
    %v2163 = vadd.f32 0.0, %v2162
    %2164 = vmatmul.bf16.gmra.mxu0 %v2079
    %v2165 = vpop.f32.mrf.mxu0
    %v2166 = vadd.f32 0.0, %v2165
    %v2167 = vpop.f32.mrf.mxu0
    %v2168 = vadd.f32 0.0, %v2167
    %2169 = vmatmul.bf16.gmra.mxu0 %v2082
    %v2170 = vpop.f32.mrf.mxu0
    %v2171 = vadd.f32 0.0, %v2170
    %v2172 = vpop.f32.mrf.mxu0
    %v2173 = vadd.f32 0.0, %v2172
    %2174 = vmatmul.bf16.gmra.mxu0 %v2085
    %v2175 = vpop.f32.mrf.mxu0
    %v2176 = vadd.f32 0.0, %v2175
    %v2177 = vpop.f32.mrf.mxu0
    %v2178 = vadd.f32 0.0, %v2177
    %2179 = vmatmul.bf16.gmra.mxu0 %v2088
    %v2180 = vpop.f32.mrf.mxu0
    %v2181 = vadd.f32 0.0, %v2180
    %v2182 = vpop.f32.mrf.mxu0
    %v2183 = vadd.f32 0.0, %v2182
    %2184 = vmatmul.bf16.gmra.mxu0 %v2091
    %v2185 = vpop.f32.mrf.mxu0
    %v2186 = vadd.f32 0.0, %v2185
    %v2187 = vpop.f32.mrf.mxu0
    %v2188 = vadd.f32 0.0, %v2187
    %2189 = vmatmul.bf16.gmra.mxu0 %v2094
    %v2190 = vpop.f32.mrf.mxu0
    %v2191 = vadd.f32 0.0, %v2190
    %v2192 = vpop.f32.mrf.mxu0
    %v2193 = vadd.f32 0.0, %v2192
    %2194 = vmatmul.bf16.gmra.mxu0 %v2097
    %v2195 = vpop.f32.mrf.mxu0
    %v2196 = vadd.f32 0.0, %v2195
    %v2197 = vpop.f32.mrf.mxu0
    %v2198 = vadd.f32 0.0, %v2197
    %2199 = vmatmul.bf16.gmra.mxu0 %v2100
    %v2200 = vpop.f32.mrf.mxu0
    %v2201 = vadd.f32 0.0, %v2200
    %v2202 = vpop.f32.mrf.mxu0
    %v2203 = vadd.f32 0.0, %v2202
    %2204 = vmatmul.bf16.gmra.mxu0 %v2103
    %v2205 = vpop.f32.mrf.mxu0
    %v2206 = vadd.f32 0.0, %v2205
    %v2207 = vpop.f32.mrf.mxu0
    %v2208 = vadd.f32 0.0, %v2207
    %2209 = vmatmul.bf16.gmra.mxu0 %v2106
    %v2210 = vpop.f32.mrf.mxu0
    %v2211 = vadd.f32 0.0, %v2210
    %v2212 = vpop.f32.mrf.mxu0
    %v2213 = vadd.f32 0.0, %v2212
    %2214 = vmatmul.bf16.gmra.mxu0 %v2109
    %v2215 = vpop.f32.mrf.mxu0
    %v2216 = vadd.f32 0.0, %v2215
    %v2217 = vpop.f32.mrf.mxu0
    %v2218 = vadd.f32 0.0, %v2217
    %2219 = vmatmul.bf16.gmra.mxu0 %v2112
    %v2220 = vpop.f32.mrf.mxu0
    %v2221 = vadd.f32 0.0, %v2220
    %v2222 = vpop.f32.mrf.mxu0
    %v2223 = vadd.f32 0.0, %v2222
    %2224 = vmatmul.bf16.gmra.mxu0 %v2115
    %v2225 = vpop.f32.mrf.mxu0
    %v2226 = vadd.f32 0.0, %v2225
    %v2227 = vpop.f32.mrf.mxu0
    %v2228 = vadd.f32 0.0, %v2227
    %2229 = vmatmul.bf16.gmra.mxu0 %v2118
    %v2230 = vpop.f32.mrf.mxu0
    %v2231 = vadd.f32 0.0, %v2230
    %v2232 = vpop.f32.mrf.mxu0
    %v2233 = vadd.f32 0.0, %v2232
    %2234 = vmatmul.bf16.gmra.mxu0 %v2121
    %v2235 = vpop.f32.mrf.mxu0
    %v2236 = vadd.f32 0.0, %v2235
    %v2237 = vpop.f32.mrf.mxu0
    %v2238 = vadd.f32 0.0, %v2237
    %2239 = vmatmul.bf16.gmra.mxu0 %v2124
    %v2240 = vpop.f32.mrf.mxu0
    %v2241 = vadd.f32 0.0, %v2240
    %v2242 = vpop.f32.mrf.mxu0
    %v2243 = vadd.f32 0.0, %v2242
    %2244 = vmatmul.bf16.gmra.mxu0 %v2127
    %v2245 = vpop.f32.mrf.mxu0
    %v2246 = vadd.f32 0.0, %v2245
    %v2247 = vpop.f32.mrf.mxu0
    %v2248 = vadd.f32 0.0, %v2247
    %2249 = vmatmul.bf16.gmra.mxu0 %v2130
    %v2250 = vpop.f32.mrf.mxu0
    %v2251 = vadd.f32 0.0, %v2250
    %v2252 = vpop.f32.mrf.mxu0
    %v2253 = vadd.f32 0.0, %v2252
    %2254 = vmatmul.bf16.gmra.mxu0 %v2133
    %v2255 = vpop.f32.mrf.mxu0
    %v2256 = vadd.f32 0.0, %v2255
    %v2257 = vpop.f32.mrf.mxu0
    %v2258 = vadd.f32 0.0, %v2257
    %2259 = vmatmul.bf16.gmra.mxu0 %v2136
    %v2260 = vpop.f32.mrf.mxu0
    %v2261 = vadd.f32 0.0, %v2260
    %v2262 = vpop.f32.mrf.mxu0
    %v2263 = vadd.f32 0.0, %v2262
    %2264 = vmatmul.bf16.gmra.mxu0 %v2139
    %v2265 = vpop.f32.mrf.mxu0
    %v2266 = vadd.f32 0.0, %v2265
    %v2267 = vpop.f32.mrf.mxu0
    %v2268 = vadd.f32 0.0, %v2267
    %2269 = vmatmul.bf16.gmra.mxu0 %v2142
    %v2270 = vpop.f32.mrf.mxu0
    %v2271 = vadd.f32 0.0, %v2270
    %v2272 = vpop.f32.mrf.mxu0
    %v2273 = vadd.f32 0.0, %v2272
    %2274 = vmatmul.bf16.gmra.mxu0 %v2145
    %v2275 = vpop.f32.mrf.mxu0
    %v2276 = vadd.f32 0.0, %v2275
    %v2277 = vpop.f32.mrf.mxu0
    %v2278 = vadd.f32 0.0, %v2277
    %2279 = vdwg.mxu0
    %v2280 = vmul.f32 %v2161, %v1652
    %v2281 = vmul.f32 %v2163, %v1653
    %v2282 = vmul.f32 %v2166, %v1654
    %v2283 = vmul.f32 %v2168, %v1655
    %v2284 = vmul.f32 %v2171, %v1656
    %v2285 = vmul.f32 %v2173, %v1657
    %v2286 = vmul.f32 %v2176, %v1658
    %v2287 = vmul.f32 %v2178, %v1659
    %v2288 = vmul.f32 %v2181, %v1660
    %v2289 = vmul.f32 %v2183, %v1661
    %v2290 = vmul.f32 %v2186, %v1662
    %v2291 = vmul.f32 %v2188, %v1663
    %v2292 = vmul.f32 %v2191, %v1664
    %v2293 = vmul.f32 %v2193, %v1665
    %v2294 = vmul.f32 %v2196, %v1666
    %v2295 = vmul.f32 %v2198, %v1667
    %v2296 = vmul.f32 %v2201, %v1668
    %v2297 = vmul.f32 %v2203, %v1669
    %v2298 = vmul.f32 %v2206, %v1670
    %v2299 = vmul.f32 %v2208, %v1671
    %v2300 = vmul.f32 %v2211, %v1672
    %v2301 = vmul.f32 %v2213, %v1673
    %v2302 = vmul.f32 %v2216, %v1674
    %v2303 = vmul.f32 %v2218, %v1675
    %v2304 = vmul.f32 %v2221, %v1676
    %v2305 = vmul.f32 %v2223, %v1677
    %v2306 = vmul.f32 %v2226, %v1678
    %v2307 = vmul.f32 %v2228, %v1679
    %v2308 = vmul.f32 %v2231, %v1680
    %v2309 = vmul.f32 %v2233, %v1681
    %v2310 = vmul.f32 %v2236, %v1682
    %v2311 = vmul.f32 %v2238, %v1683
    %v2312 = vmul.f32 %v2241, %v1684
    %v2313 = vmul.f32 %v2243, %v1685
    %v2314 = vmul.f32 %v2246, %v1686
    %v2315 = vmul.f32 %v2248, %v1687
    %v2316 = vmul.f32 %v2251, %v1688
    %v2317 = vmul.f32 %v2253, %v1689
    %v2318 = vmul.f32 %v2256, %v1690
    %v2319 = vmul.f32 %v2258, %v1691
    %v2320 = vmul.f32 %v2261, %v1692
    %v2321 = vmul.f32 %v2263, %v1693
    %v2322 = vmul.f32 %v2266, %v1694
    %v2323 = vmul.f32 %v2268, %v1695
    %v2324 = vmul.f32 %v2271, %v1696
    %v2325 = vmul.f32 %v2273, %v1697
    %v2326 = vmul.f32 %v2276, %v1698
    %v2327 = vmul.f32 %v2278, %v1699
    %v2328 = vpack.c.bf16 %v2281, %v2280
    %v2329 = vpack.c.bf16 %v2283, %v2282
    %v2330 = vpack.c.bf16 %v2285, %v2284
    %v2331 = vpack.c.bf16 %v2287, %v2286
    %v2332 = vpack.c.bf16 %v2289, %v2288
    %v2333 = vpack.c.bf16 %v2291, %v2290
    %v2334 = vpack.c.bf16 %v2293, %v2292
    %v2335 = vpack.c.bf16 %v2295, %v2294
    %v2336 = vpack.c.bf16 %v2297, %v2296
    %v2337 = vpack.c.bf16 %v2299, %v2298
    %v2338 = vpack.c.bf16 %v2301, %v2300
    %v2339 = vpack.c.bf16 %v2303, %v2302
    %v2340 = vpack.c.bf16 %v2305, %v2304
    %v2341 = vpack.c.bf16 %v2307, %v2306
    %v2342 = vpack.c.bf16 %v2309, %v2308
    %v2343 = vpack.c.bf16 %v2311, %v2310
    %v2344 = vpack.c.bf16 %v2313, %v2312
    %v2345 = vpack.c.bf16 %v2315, %v2314
    %v2346 = vpack.c.bf16 %v2317, %v2316
    %v2347 = vpack.c.bf16 %v2319, %v2318
    %v2348 = vpack.c.bf16 %v2321, %v2320
    %v2349 = vpack.c.bf16 %v2323, %v2322
    %v2350 = vpack.c.bf16 %v2325, %v2324
    %v2351 = vpack.c.bf16 %v2327, %v2326
    %v2352 = vld [vmem:[%s6] sm:$0xff]
    %v2353 = vld [vmem:[%s6 + $0x8] sm:$0xff]
    %v2354 = vld [vmem:[%s6 + $0x10] sm:$0xff]
    %v2355 = vld [vmem:[%s116] sm:$0x7]
    %2356 = vset.pattern.permute.xlu0 0
    %2357 = vperm.xlu0 %2356, %v2352
    %v2358 = vpop.permute.xlu0 %2357
    %2359 = vset.pattern.permute.xlu0 0
    %2360 = vperm.xlu0 %2359, %v2353
    %v2361 = vpop.permute.xlu0 %2360
    %2362 = vset.pattern.permute.xlu0 0
    %2363 = vperm.xlu0 %2362, %v2354
    %v2364 = vpop.permute.xlu0 %2363
    %v2365 = vperm.slane %v2355, 0
    %v2366 = vperm.slane %v2355, 1
    %v2367 = vperm.slane %v2355, 2
    %vm2368 = vcmp.eq.s32.totalorder %v2358, %v2365
    %vm2369 = vcmp.eq.s32.totalorder %v2358, %v2366
    %vm2370 = vcmp.eq.s32.totalorder %v2358, %v2367
    %vm2371 = vcmp.eq.s32.totalorder %v2361, %v2365
    %vm2372 = vcmp.eq.s32.totalorder %v2361, %v2366
    %vm2373 = vcmp.eq.s32.totalorder %v2361, %v2367
    %vm2374 = vcmp.eq.s32.totalorder %v2364, %v2365
    %vm2375 = vcmp.eq.s32.totalorder %v2364, %v2366
    %vm2376 = vcmp.eq.s32.totalorder %v2364, %v2367
    %v2377 = vsel %vm2368, 1, 0
    %v2378 = vsel %vm2369, 1, 0
    %v2379 = vsel %vm2370, 1, 0
    %v2380 = vsel %vm2371, 1, 0
    %v2381 = vsel %vm2372, 1, 0
    %v2382 = vsel %vm2373, 1, 0
    %v2383 = vsel %vm2374, 1, 0
    %v2384 = vsel %vm2375, 1, 0
    %v2385 = vsel %vm2376, 1, 0
    %v2386 = vcvt.s32.f32 %v2377
    %v2387 = vcvt.s32.f32 %v2378
    %v2388 = vcvt.s32.f32 %v2379
    %v2389 = vcvt.s32.f32 %v2380
    %v2390 = vcvt.s32.f32 %v2381
    %v2391 = vcvt.s32.f32 %v2382
    %v2392 = vcvt.s32.f32 %v2383
    %v2393 = vcvt.s32.f32 %v2384
    %v2394 = vcvt.s32.f32 %v2385
    %v2395 = vpack.c.bf16 %v2389, %v2386
    %v2396 = vpack.c.bf16 %v2390, %v2387
    %v2397 = vpack.c.bf16 %v2391, %v2388
    %v2398 = vpack.c.bf16 %v2392, %v2392
    %v2399 = vpack.c.bf16 %v2393, %v2393
    %v2400 = vpack.c.bf16 %v2394, %v2394
    %v2401 = vld [vmem:[#allocation3] sm:$0xff]
    %v2402 = vld [vmem:[#allocation3 + $0x8] sm:$0xff]
    %v2403 = vld [vmem:[#allocation3 + $0x10] sm:$0xff]
    %2404 = vmatpush.bf16.msra.mxu0 %v2335
    %2405 = vmatpush.bf16.msra.mxu0 %v2334
    %2406 = vmatpush.bf16.msra.mxu0 %v2333
    %2407 = vmatpush.bf16.msra.mxu0 %v2332
    %2408 = vmatpush.bf16.msra.mxu0 %v2331
    %2409 = vmatpush.bf16.msra.mxu0 %v2330
    %2410 = vmatpush.bf16.msra.mxu0 %v2329
    %2411 = vmatpush.bf16.msra.mxu0 %v2328
    %2412 = vmatmul.bf16.gmra.mxu0 %v2395
    %v2413 = vpop.f32.mrf.mxu0
    %v2414 = vadd.f32 0.0, %v2413
    %v2415 = vpop.f32.mrf.mxu0
    %v2416 = vadd.f32 0.0, %v2415
    %2417 = vmatmul.bf16.gmra.mxu0 %v2398
    %v2418 = vpop.f32.mrf.mxu0
    %v2419 = vadd.f32 0.0, %v2418
    %v2420 = vpop.f32.mrf.mxu0
    %2421 = vdwg.mxu0
    %2422 = vmatpush.bf16.msra.mxu0 %v2343
    %2423 = vmatpush.bf16.msra.mxu0 %v2342
    %2424 = vmatpush.bf16.msra.mxu0 %v2341
    %2425 = vmatpush.bf16.msra.mxu0 %v2340
    %2426 = vmatpush.bf16.msra.mxu0 %v2339
    %2427 = vmatpush.bf16.msra.mxu0 %v2338
    %2428 = vmatpush.bf16.msra.mxu0 %v2337
    %2429 = vmatpush.bf16.msra.mxu0 %v2336
    %2430 = vmatmul.bf16.gmra.mxu0 %v2396
    %v2431 = vpop.f32.mrf.mxu0
    %v2432 = vadd.f32 %v2414, %v2431
    %v2433 = vpop.f32.mrf.mxu0
    %v2434 = vadd.f32 %v2416, %v2433
    %2435 = vmatmul.bf16.gmra.mxu0 %v2399
    %v2436 = vpop.f32.mrf.mxu0
    %v2437 = vadd.f32 %v2419, %v2436
    %v2438 = vpop.f32.mrf.mxu0
    %2439 = vdwg.mxu0
    %2440 = vmatpush.bf16.msra.mxu0 %v2351
    %2441 = vmatpush.bf16.msra.mxu0 %v2350
    %2442 = vmatpush.bf16.msra.mxu0 %v2349
    %2443 = vmatpush.bf16.msra.mxu0 %v2348
    %2444 = vmatpush.bf16.msra.mxu0 %v2347
    %2445 = vmatpush.bf16.msra.mxu0 %v2346
    %2446 = vmatpush.bf16.msra.mxu0 %v2345
    %2447 = vmatpush.bf16.msra.mxu0 %v2344
    %2448 = vmatmul.bf16.gmra.mxu0 %v2397
    %v2449 = vpop.f32.mrf.mxu0
    %v2450 = vadd.f32 %v2432, %v2449
    %v2451 = vpop.f32.mrf.mxu0
    %v2452 = vadd.f32 %v2434, %v2451
    %2453 = vmatmul.bf16.gmra.mxu0 %v2400
    %v2454 = vpop.f32.mrf.mxu0
    %v2455 = vadd.f32 %v2437, %v2454
    %v2456 = vpop.f32.mrf.mxu0
    %2457 = vdwg.mxu0
    %v2458 = vadd.f32 %v2401, %v2450
    %v2459 = vadd.f32 %v2402, %v2452
    %v2460 = vadd.f32 %v2403, %v2455
    %2461 = vst [vmem:[#allocation3] sm:$0xff] %v2458
    %2462 = vst [vmem:[#allocation3 + $0x8] sm:$0xff] %v2459
    %2463 = vst [vmem:[#allocation3 + $0x10] sm:$0xff] %v2460
    // Predicated region
    $region54: #{tpu_custom_call.1} parent=1 // pred_check
      _
    $region55: #{tpu_custom_call.1} parent=1 // pred_check_branch
      %2465 = sbr.rel (0) target = $region57
    $region56: #{tpu_custom_call.1} parent=1 // pred_region
      %2467 = vsyncadd [#allocation4], 0
      %s2468 = sshll.u32 [#allocation3], 4
      %s2469 = int_to_ptr.vmem [resolvable:$true] %s2468
      %s2470 = sshll.u32 %s12, 4
      %s2471 = int_to_ptr.hbm [resolvable:$true] %s2470
      %2476 = dma.vmem_to_hbm [thread:$0]  %s2469, 384, %s2471, [#allocation4], 128, 128, 8
    $region57: #{tpu_custom_call.1} parent=1 // pred_fallthru
      _
    // Predicated region
    $region58: #{tpu_custom_call.1} parent=1 // pred_check
      _
    $region59: #{tpu_custom_call.1} parent=1 // pred_check_branch
      %2478 = sbr.rel (0) target = $region61
    $region60: #{tpu_custom_call.1} parent=1 // pred_region
      %2480 = dma.done [#allocation4], 384
    $region61: #{tpu_custom_call.1} parent=1 // pred_fallthru
      _
    %2481 = vsyncpa [#allocation4], 1

</llo_original>
